<compile_context>
chip_gen: v5e
topology: v5e:2x2
jax: 0.10.0
libtpu: 0.0.40
codegen_flags: <defaults>
</compile_context>

<pallas_src>
import functools

import jax
import jax.numpy as jnp
from jax import lax
from jax.experimental import pallas as pl
from jax.experimental.pallas import tpu as pltpu

NORMALIZER = 16.0
LN_EPS = 1e-5


def _log_sigmoid(x):
    # numerically stable log-sigmoid(x) = min(x, 0) - log(1 + exp(-|x|))
    return jnp.minimum(x, 0.0) - jnp.log(1.0 + jnp.exp(-jnp.abs(x)))


def _sigmoid(x):
    return 1.0 / (1.0 + jnp.exp(-x))


# ----------------------------------------------------------------------------
# Pallas kernel: chunked gated linear attention (gate on keys only), fused
# with per-head LayerNorm (no affine) and the silu(g) output gate.
#   q_ref, k_ref : (C, H*dk) bf16          gk_ref : (C, H*dk) f32 log-decays
#   v_ref, g_ref : (C, H*dv) bf16
#   out_ref      : (C, H*dv) bf16          state_ref : (H, dv, dk) f32
#   o_scr        : (C, H*dv) f32 VMEM scratch (pre-LN accumulator)
# ----------------------------------------------------------------------------
def _gla_chunk_kernel(q_ref, k_ref, gk_ref, v_ref, g_ref, out_ref, state_ref,
                      o_scr, *, sub_chunk, num_heads, head_k, head_v):
    c = pl.program_id(1)
    C = q_ref.shape[0]
    H, dk, dv = num_heads, head_k, head_v
    S = sub_chunk
    n_sub = C // S

    # state_ref doubles as the cross-chunk accumulator: its block index is
    # constant along the (sequential, innermost) chunk axis, so it stays
    # resident in VMEM and only hits HBM once at the end.
    @pl.when(c == 0)
    def _():
        state_ref[...] = jnp.zeros_like(state_ref)

    # Lower-triangular (inclusive) matrix, reused for the cumsum matmul and as
    # the causal mask (A * tri instead of a fresh compare + select).
    row = lax.broadcasted_iota(jnp.int32, (S, S), 0)
    col = lax.broadcasted_iota(jnp.int32, (S, S), 1)
    tri = (row >= col).astype(jnp.float32)

    def sub_body(s, carry):
        start = pl.multiple_of(s * S, S)
        sl = pl.ds(start, S)

        q_all = q_ref[sl, :].astype(jnp.float32)    # (S, H*dk)
        k_all = k_ref[sl, :].astype(jnp.float32)    # (S, H*dk)
        gk_all = gk_ref[sl, :]                      # (S, H*dk) f32, <= 0
        v_all = v_ref[sl, :]                        # (S, H*dv) bf16

        for h in range(H):                          # static; H is small
            ksl = slice(h * dk, (h + 1) * dk)
            vsl = slice(h * dv, (h + 1) * dv)

            # --- gate math in f32; decays relative to the sub-chunk start so
            #     every exp() argument is bounded by S * |gk|.
            gk = gk_all[:, ksl]                                        # (S, dk)
            b = jnp.dot(tri, gk, preferred_element_type=jnp.float32)  # incl. cumsum
            e_pos = jnp.exp(b)                                         # <= 1
            e_tot = e_pos[S - 1:, :]                                   # (1, dk), reuse
            e_neg = pl.reciprocal(e_pos, approx=True)                  # exp(-b)

            q = q_all[:, ksl]
            k = k_all[:, ksl]
            v = v_all[:, vsl]                                          # bf16 (S, dv)

            # bf16 MXU operands, f32 accumulation
            q_s = (q * e_pos).astype(jnp.bfloat16)
            k_s = (k * e_neg).astype(jnp.bfloat16)
            k_l = (k * (e_tot * e_neg)).astype(jnp.bfloat16)           # k*exp(b_tot-b)

            s_prev = state_ref[h]                                      # (dv, dk) f32

            # inter contribution: (q * exp(b)) @ S_prev^T  (contract over dk)
            o_acc = lax.dot_general(q_s, s_prev.astype(jnp.bfloat16),
                                    (((1,), (1,)), ((), ())),
                                    preferred_element_type=jnp.float32)  # (S, dv)

            # intra (causal) contribution
            A = lax.dot_general(q_s, k_s, (((1,), (1,)), ((), ())),
                                preferred_element_type=jnp.float32)      # (S, S)
            A = (A * tri).astype(jnp.bfloat16)
            o_acc = o_acc + jnp.dot(A, v, preferred_element_type=jnp.float32)

            # state update (transposed (dv, dk) so e_tot broadcasts along lanes)
            state_ref[h] = s_prev * e_tot + lax.dot_general(
                v, k_l, (((0,), (0,)), ((), ())),
                preferred_element_type=jnp.float32)

            o_scr[sl, vsl] = o_acc
        return carry

    lax.fori_loop(0, n_sub, sub_body, 0,
                  unroll=True if n_sub <= 4 else 4)

    # Chunk-level epilogue: per-head LayerNorm over dv (eps=1e-5, no affine),
    # silu(g) gate, one lane-dense (C, H*dv) store.
    for h in range(H):
        vsl = slice(h * dv, (h + 1) * dv)
        o_h = o_scr[:, vsl]                                            # (C, dv) f32
        mu = jnp.mean(o_h, axis=-1, keepdims=True)
        xc = o_h - mu
        var = jnp.mean(xc * xc, axis=-1, keepdims=True)
        o_scr[:, vsl] = xc * lax.rsqrt(var + LN_EPS)

    g_all = g_ref[...].astype(jnp.float32)
    out_ref[...] = (g_all * _sigmoid(g_all) * o_scr[...]).astype(out_ref.dtype)


def _pick_chunk_and_pad(L, target):
    """Largest chunk <= target (multiple of 8) dividing L, else pad L."""
    if L <= target:
        return L, L
    c = min(target, L) // 8 * 8
    while c >= 8:
        if L % c == 0:
            return c, L
        c -= 8
    c = max(8, target // 8 * 8)
    return c, -(-L // c) * c


def _pick_sub_chunk(C, requested):
    if requested is not None and 0 < requested <= C and C % requested == 0:
        return requested
    for s in (64, 32, 16, 8):
        if C % s == 0:
            return s
    return C


def gla_attention_pallas(q, k, v, gk_raw, g, num_heads,
                         chunk_size=None, sub_chunk=None):
    """Returns (gated+normed output (B, L, E) bf16, final state (B, H, dk, dv) f32)."""
    B, L, Dq = q.shape
    E = v.shape[-1]
    H = num_heads
    dk = Dq // H
    dv = E // H

    # Lane-dense (B, L, H*d) slabs, no wrapper-side transposes.  bf16 inputs
    # halve the kernel's DMA traffic.
    qb = q.astype(jnp.bfloat16)
    kb = k.astype(jnp.bfloat16)
    vb = v.astype(jnp.bfloat16)
    gb = g.astype(jnp.bfloat16)
    # logsigmoid/NORMALIZER fused into the projection epilogue (removes the
    # in-kernel log1p/exp pair; EUP relief, biggest on v5e).  Shipped in f32
    # because the cumsum/exp path needs >= f32 precision.
    # TODO(synk): optionally ship gk in bf16 (~15-20% less HBM traffic) after
    # validating recurrent-state drift at long L.
    gkd = _log_sigmoid(gk_raw.astype(jnp.float32)) / NORMALIZER

    target = chunk_size if chunk_size is not None else 256
    C, L_pad = _pick_chunk_and_pad(L, target)
    S = _pick_sub_chunk(C, sub_chunk)

    if L_pad != L:
        pad = L_pad - L
        padz = lambda t: jnp.pad(t, ((0, 0), (0, pad), (0, 0)))
        qb, kb, vb, gb = padz(qb), padz(kb), padz(vb), padz(gb)
        # log-decay 0 => padded steps neither decay the state nor contribute
        gkd = padz(gkd)

    n_chunks = L_pad // C
    # TODO(synk): if B == 1 on v7x, split heads into 2 groups on the leading
    # grid axis so both TensorCores are used.
    grid = (B, n_chunks)

    def xmap(b, c):
        return (b, c, 0)

    def smap(b, c):
        return (b, 0, 0, 0)

    in_specs = [
        pl.BlockSpec((None, C, Dq), xmap),   # q   (bf16)
        pl.BlockSpec((None, C, Dq), xmap),   # k   (bf16)
        pl.BlockSpec((None, C, Dq), xmap),   # gk  (f32 log-decays)
        pl.BlockSpec((None, C, E), xmap),    # v   (bf16)
        pl.BlockSpec((None, C, E), xmap),    # g   (bf16)
    ]
    out_specs = (
        pl.BlockSpec((None, C, E), xmap),          # o (bf16), lane-dense store
        pl.BlockSpec((None, H, dv, dk), smap),     # state^T (f32), resident
    )
    out_shapes = (
        jax.ShapeDtypeStruct((B, L_pad, E), jnp.bfloat16),
        jax.ShapeDtypeStruct((B, H, dv, dk), jnp.float32),
    )

    # Advisory cost estimate so XLA schedules the surrounding projection
    # matmuls sensibly around the custom call.
    flops = int(B * H * L_pad * (4 * dk * dv + 2 * S * (2 * dk + dv)))
    trans = int(B * L_pad * (H * dk + E))
    nbytes = int(B * L_pad * (8 * Dq + 6 * E) + B * H * dk * dv * 4)

    o, state_t = pl.pallas_call(
        functools.partial(_gla_chunk_kernel, sub_chunk=S, num_heads=H,
                          head_k=dk, head_v=dv),
        grid=grid,
        in_specs=in_specs,
        out_specs=out_specs,
        out_shape=out_shapes,
        scratch_shapes=[pltpu.VMEM((C, E), jnp.float32)],
        compiler_params=pltpu.CompilerParams(
            dimension_semantics=("parallel", "arbitrary")),
        cost_estimate=pl.CostEstimate(flops=flops, transcendentals=trans,
                                      bytes_accessed=nbytes),
    )(qb, kb, gkd, vb, gb)

    o = o[:, :L]                                   # (B, L, E), already head-merged
    final_state = jnp.swapaxes(state_t, -1, -2)    # (B, H, dk, dv)
    return o, final_state


# ----------------------------------------------------------------------------
# Parameter init (deterministic, shapes from the PyTorch module __init__)
# ----------------------------------------------------------------------------
def _xavier_uniform(key, shape, gain):
    fan_in, fan_out = shape
    limit = gain * (6.0 / (fan_in + fan_out)) ** 0.5
    return jax.random.uniform(key, shape, jnp.float32, -limit, limit)


def _linear_default(key, fan_in, shape):
    limit = 1.0 / (fan_in ** 0.5)
    return jax.random.uniform(key, shape, jnp.float32, -limit, limit)


def init_params(key, d_model, n_head):
    ks = jax.random.split(key, 9)
    gain = 2.0 ** (-2.5)
    half = d_model // 2
    return {
        "wq": _xavier_uniform(ks[0], (d_model, half), gain),
        "wk": _xavier_uniform(ks[1], (d_model, half), gain),
        "wg0": _xavier_uniform(ks[2], (d_model, 16), gain),
        "wg1": _xavier_uniform(ks[3], (16, half), gain),
        "bg1": _linear_default(ks[4], 16, (half,)),
        "wv": _linear_default(ks[5], d_model, (d_model, d_model)),
        "wgp": _linear_default(ks[6], d_model, (d_model, d_model)),
        "bgp": _linear_default(ks[7], d_model, (d_model,)),
        "wout": _linear_default(ks[8], d_model, (d_model, d_model)),
    }


def _projections(params, x, n_head):
    d_model = x.shape[-1]
    key_dim = d_model // n_head                 # module uses embed_dim // n_head here
    scaling = key_dim ** (-0.5)
    q = x @ params["wq"]
    k = (x @ params["wk"]) * scaling
    gk_raw = (x @ params["wg0"]) @ params["wg1"] + params["bg1"]
    v = x @ params["wv"]
    g = x @ params["wgp"] + params["bgp"]
    return q, k, v, gk_raw, g


def gla_forward(params, x, n_head, chunk_size=None, sub_chunk=None):
    # TODO(synk): non-None initial hidden_states (recurrent cache) is not plumbed
    # into the kernel; only the hidden_states=None path is implemented.
    q, k, v, gk_raw, g = _projections(params, x, n_head)
    o, new_state = gla_attention_pallas(q, k, v, gk_raw, g, n_head,
                                        chunk_size, sub_chunk)
    out = jnp.dot(o, params["wout"])            # bf16 o, f32 weights -> f32 out
    return out, new_state


# ----------------------------------------------------------------------------
# Pure-JAX reference (sequential recurrence) for a correctness check
# ----------------------------------------------------------------------------
def reference_forward(params, x, n_head):
    B, L, d_model = x.shape
    q, k, v, gk_raw, g = _projections(params, x, n_head)
    # The Pallas kernel consumes q/k/v/g rounded to bf16; apply the identical
    # rounding here so the comparison isolates the kernel's algorithmic error.
    rt = lambda t: t.astype(jnp.bfloat16).astype(jnp.float32)
    q, k, v, g = rt(q), rt(k), rt(v), rt(g)
    dk = q.shape[-1] // n_head
    dv = v.shape[-1] // n_head

    def split_heads(t, d):
        return jnp.transpose(t.reshape(B, L, n_head, d), (0, 2, 1, 3))

    qh, kh = split_heads(q, dk), split_heads(k, dk)
    vh, gh = split_heads(v, dv), split_heads(g, dv)
    gk = _log_sigmoid(split_heads(gk_raw, dk)) / NORMALIZER

    def step(S, xs):
        q_t, k_t, v_t, gk_t = xs                      # (B,H,dk)/(B,H,dv)
        S = S * jnp.exp(gk_t)[..., None] + k_t[..., None] * v_t[..., None, :]
        o_t = jnp.einsum("bhd,bhde->bhe", q_t, S)
        return S, o_t

    xs = (jnp.moveaxis(qh, 2, 0), jnp.moveaxis(kh, 2, 0),
          jnp.moveaxis(vh, 2, 0), jnp.moveaxis(gk, 2, 0))
    S0 = jnp.zeros((B, n_head, dk, dv), jnp.float32)
    S_fin, o = lax.scan(step, S0, xs)
    o = jnp.moveaxis(o, 0, 2)                         # (B,H,L,dv)

    mu = o.mean(-1, keepdims=True)
    var = ((o - mu) ** 2).mean(-1, keepdims=True)
    o_n = (o - mu) / jnp.sqrt(var + LN_EPS)
    out = gh * _sigmoid(gh) * o_n
    out = jnp.transpose(out, (0, 2, 1, 3)).reshape(B, L, d_model)
    out = out @ params["wout"]
    return out, S_fin


if __name__ == "__main__":
    d_model, n_head = 64, 2
    B, L = 2, 32
    key = jax.random.PRNGKey(0)
    pkey, xkey = jax.random.split(key)
    params = init_params(pkey, d_model, n_head)
    x = jax.random.normal(xkey, (B, L, d_model), jnp.float32)

    # chunk_size=16 / sub_chunk=8 exercises both the cross-chunk state carry
    # (2 grid steps along the chunk axis) and the in-kernel sub-chunk loop.
    fwd = jax.jit(functools.partial(gla_forward, n_head=n_head,
                                    chunk_size=16, sub_chunk=8))
    out, state = fwd(params, x)
    jax.block_until_ready((out, state))

    ref_out, ref_state = reference_forward(params, x, n_head)
    dk = d_model // (2 * n_head)
    dv = d_model // n_head
    assert out.shape == (B, L, d_model)
    assert state.shape == (B, n_head, dk, dv)
    assert jnp.allclose(out, ref_out, atol=2e-2, rtol=2e-2), (
        float(jnp.max(jnp.abs(out - ref_out))))
    assert jnp.allclose(state, ref_state, atol=2e-2, rtol=2e-2), (
        float(jnp.max(jnp.abs(state - ref_state))))
    print("KERNEL_OK")
</pallas_src>

<mosaic_0001>
module attributes {stable_mosaic.version = 11 : i64} {
  func.func @_gla_chunk_kernel(%arg0: i32, %arg1: i32, %arg2: memref<1x16x32xbf16, #tpu.memory_space<vmem>>, %arg3: memref<1x16x32xbf16, #tpu.memory_space<vmem>>, %arg4: memref<1x16x32xf32, #tpu.memory_space<vmem>>, %arg5: memref<1x16x64xbf16, #tpu.memory_space<vmem>>, %arg6: memref<1x16x64xbf16, #tpu.memory_space<vmem>>, %arg7: memref<1x16x64xbf16, #tpu.memory_space<vmem>>, %arg8: memref<1x2x32x16xf32, #tpu.memory_space<vmem>>, %arg9: memref<16x64xf32, #tpu.memory_space<vmem>>) attributes {dimension_semantics = [#tpu.dimension_semantics<parallel>, #tpu.dimension_semantics<arbitrary>], iteration_bounds = array<i64: 2, 2>, scalar_prefetch = 0 : i64, scratch_operands = 1 : i64, tpu.core_type = #tpu.core_type<tc>, window_params = [{transform_indices = @transform_0, window_bounds = array<i64: 1, 16, 32>}, {transform_indices = @transform_1, window_bounds = array<i64: 1, 16, 32>}, {transform_indices = @transform_2, window_bounds = array<i64: 1, 16, 32>}, {transform_indices = @transform_3, window_bounds = array<i64: 1, 16, 64>}, {transform_indices = @transform_4, window_bounds = array<i64: 1, 16, 64>}, {transform_indices = @transform_5, window_bounds = array<i64: 1, 16, 64>}, {transform_indices = @transform_6, window_bounds = array<i64: 1, 2, 32, 16>}]} {
    %c0_i32 = arith.constant 0 : i32
    %0 = arith.cmpi eq, %arg1, %c0_i32 : i32
    %1 = arith.extui %0 : i1 to i32
    %c0_i32_0 = arith.constant 0 : i32
    %2 = arith.cmpi ne, %1, %c0_i32_0 : i32
    scf.if %2 {
      %cst_100 = arith.constant 0.000000e+00 : f32
      %229 = vector.broadcast %cst_100 : f32 to vector<2x32x16xf32>
      %c0_101 = arith.constant 0 : index
      %c0_102 = arith.constant 0 : index
      %c0_103 = arith.constant 0 : index
      %c0_104 = arith.constant 0 : index
      %230 = vector.load %arg8[%c0_101, %c0_102, %c0_103, %c0_104] : memref<1x2x32x16xf32, #tpu.memory_space<vmem>>, vector<1x2x32x16xf32>
      %231 = vector.shape_cast %230 : vector<1x2x32x16xf32> to vector<2x32x16xf32>
      %232 = vector.shape_cast %229 : vector<2x32x16xf32> to vector<1x2x32x16xf32>
      tpu.vector_store %arg8[%c0_101, %c0_102, %c0_103, %c0_104], %232 {strides = array<i32>} : memref<1x2x32x16xf32, #tpu.memory_space<vmem>>, vector<1x2x32x16xf32>,
    } else {
    }
    %3 = tpu.iota {dimensions = array<i32: 0>} : vector<8x8xi32>
    %4 = tpu.iota {dimensions = array<i32: 1>} : vector<8x8xi32>
    %5 = arith.cmpi sge, %3, %4 : vector<8x8xi32>
    %6 = arith.extui %5 : vector<8x8xi1> to vector<8x8xi32>
    %7 = arith.sitofp %6 : vector<8x8xi32> to vector<8x8xf32>
    %c0_i32_1 = arith.constant 0 : i32
    %c8_i32 = arith.constant 8 : i32
    %8 = arith.muli %c0_i32_1, %c8_i32 : i32
    %9 = tpu.assume_multiple %8, 8 : i32
    %c0 = arith.constant 0 : index
    %10 = arith.index_cast %9 : i32 to index
    %c0_2 = arith.constant 0 : index
    %11 = vector.load %arg2[%c0, %10, %c0_2] : memref<1x16x32xbf16, #tpu.memory_space<vmem>>, vector<1x8x32xbf16>
    %12 = vector.shape_cast %11 : vector<1x8x32xbf16> to vector<8x32xbf16>
    %13 = arith.extf %12 : vector<8x32xbf16> to vector<8x32xf32>
    %c0_3 = arith.constant 0 : index
    %14 = arith.index_cast %9 : i32 to index
    %c0_4 = arith.constant 0 : index
    %15 = vector.load %arg3[%c0_3, %14, %c0_4] : memref<1x16x32xbf16, #tpu.memory_space<vmem>>, vector<1x8x32xbf16>
    %16 = vector.shape_cast %15 : vector<1x8x32xbf16> to vector<8x32xbf16>
    %17 = arith.extf %16 : vector<8x32xbf16> to vector<8x32xf32>
    %c0_5 = arith.constant 0 : index
    %18 = arith.index_cast %9 : i32 to index
    %c0_6 = arith.constant 0 : index
    %19 = vector.load %arg4[%c0_5, %18, %c0_6] : memref<1x16x32xf32, #tpu.memory_space<vmem>>, vector<1x8x32xf32>
    %20 = vector.shape_cast %19 : vector<1x8x32xf32> to vector<8x32xf32>
    %c0_7 = arith.constant 0 : index
    %21 = arith.index_cast %9 : i32 to index
    %c0_8 = arith.constant 0 : index
    %22 = vector.load %arg5[%c0_7, %21, %c0_8] : memref<1x16x64xbf16, #tpu.memory_space<vmem>>, vector<1x8x64xbf16>
    %23 = vector.shape_cast %22 : vector<1x8x64xbf16> to vector<8x64xbf16>
    %24 = vector.extract_strided_slice %20 {offsets = [0, 0], sizes = [8, 16], strides = [1, 1]} : vector<8x32xf32> to vector<8x16xf32>
    %cst = arith.constant dense<0.000000e+00> : vector<8x16xf32>
    %25 = tpu.matmul %7, %24, %cst {dimension_numbers = #tpu.dot_dimension_numbers<[1], [0], [0], [1], [0, 0, 1, 1], [], []>} : vector<8x8xf32>, vector<8x16xf32>, vector<8x16xf32> -> vector<8x16xf32>
    %26 = math.exp %25 : vector<8x16xf32>
    %27 = vector.extract_strided_slice %26 {offsets = [7, 0], sizes = [1, 16], strides = [1, 1]} : vector<8x16xf32> to vector<1x16xf32>
    %28 = tpu.reciprocal %26 {approx = true} : vector<8x16xf32> -> vector<8x16xf32>
    %29 = vector.extract_strided_slice %13 {offsets = [0, 0], sizes = [8, 16], strides = [1, 1]} : vector<8x32xf32> to vector<8x16xf32>
    %30 = vector.extract_strided_slice %17 {offsets = [0, 0], sizes = [8, 16], strides = [1, 1]} : vector<8x32xf32> to vector<8x16xf32>
    %31 = vector.extract_strided_slice %23 {offsets = [0, 0], sizes = [8, 32], strides = [1, 1]} : vector<8x64xbf16> to vector<8x32xbf16>
    %32 = arith.mulf %29, %26 : vector<8x16xf32>
    %33 = arith.truncf %32 : vector<8x16xf32> to vector<8x16xbf16>
    %34 = arith.mulf %30, %28 : vector<8x16xf32>
    %35 = arith.truncf %34 : vector<8x16xf32> to vector<8x16xbf16>
    %36 = vector.broadcast %27 : vector<1x16xf32> to vector<8x16xf32>
    %37 = arith.mulf %36, %28 : vector<8x16xf32>
    %38 = arith.mulf %30, %37 : vector<8x16xf32>
    %39 = arith.truncf %38 : vector<8x16xf32> to vector<8x16xbf16>
    %c0_9 = arith.constant 0 : index
    %c0_10 = arith.constant 0 : index
    %c0_11 = arith.constant 0 : index
    %c0_12 = arith.constant 0 : index
    %40 = vector.load %arg8[%c0_9, %c0_10, %c0_11, %c0_12] : memref<1x2x32x16xf32, #tpu.memory_space<vmem>>, vector<1x1x32x16xf32>
    %41 = vector.shape_cast %40 : vector<1x1x32x16xf32> to vector<32x16xf32>
    %42 = arith.truncf %41 : vector<32x16xf32> to vector<32x16xbf16>
    %cst_13 = arith.constant dense<0.000000e+00> : vector<8x32xf32>
    %43 = tpu.matmul %33, %42, %cst_13 {dimension_numbers = #tpu.dot_dimension_numbers<[1], [1], [0], [0], [0, 0, 1, 0], [], []>} : vector<8x16xbf16>, vector<32x16xbf16>, vector<8x32xf32> -> vector<8x32xf32>
    %cst_14 = arith.constant dense<0.000000e+00> : vector<8x8xf32>
    %44 = tpu.matmul %33, %35, %cst_14 {dimension_numbers = #tpu.dot_dimension_numbers<[1], [1], [0], [0], [0, 0, 1, 0], [], []>} : vector<8x16xbf16>, vector<8x16xbf16>, vector<8x8xf32> -> vector<8x8xf32>
    %45 = arith.mulf %44, %7 : vector<8x8xf32>
    %46 = arith.truncf %45 : vector<8x8xf32> to vector<8x8xbf16>
    %cst_15 = arith.constant dense<0.000000e+00> : vector<8x32xf32>
    %47 = tpu.matmul %46, %31, %cst_15 {dimension_numbers = #tpu.dot_dimension_numbers<[1], [0], [0], [1], [0, 0, 1, 1], [], []>} : vector<8x8xbf16>, vector<8x32xbf16>, vector<8x32xf32> -> vector<8x32xf32>
    %48 = arith.addf %43, %47 : vector<8x32xf32>
    %49 = vector.broadcast %27 : vector<1x16xf32> to vector<32x16xf32>
    %50 = arith.mulf %41, %49 : vector<32x16xf32>
    %cst_16 = arith.constant dense<0.000000e+00> : vector<32x16xf32>
    %51 = tpu.matmul %31, %39, %cst_16 {dimension_numbers = #tpu.dot_dimension_numbers<[0], [0], [1], [1], [0, 1, 1, 1], [], []>} : vector<8x32xbf16>, vector<8x16xbf16>, vector<32x16xf32> -> vector<32x16xf32>
    %52 = arith.addf %50, %51 : vector<32x16xf32>
    %c0_17 = arith.constant 0 : index
    %c0_18 = arith.constant 0 : index
    %c0_19 = arith.constant 0 : index
    %c0_20 = arith.constant 0 : index
    %53 = vector.load %arg8[%c0_17, %c0_18, %c0_19, %c0_20] : memref<1x2x32x16xf32, #tpu.memory_space<vmem>>, vector<1x1x32x16xf32>
    %54 = vector.shape_cast %53 : vector<1x1x32x16xf32> to vector<32x16xf32>
    %55 = vector.shape_cast %52 : vector<32x16xf32> to vector<1x1x32x16xf32>
    tpu.vector_store %arg8[%c0_17, %c0_18, %c0_19, %c0_20], %55 {strides = array<i32>} : memref<1x2x32x16xf32, #tpu.memory_space<vmem>>, vector<1x1x32x16xf32>,
    %56 = arith.index_cast %9 : i32 to index
    %c0_21 = arith.constant 0 : index
    %57 = vector.load %arg9[%56, %c0_21] : memref<16x64xf32, #tpu.memory_space<vmem>>, vector<8x32xf32>
    tpu.vector_store %arg9[%56, %c0_21], %48 {strides = array<i32>} : memref<16x64xf32, #tpu.memory_space<vmem>>, vector<8x32xf32>,
    %58 = vector.extract_strided_slice %20 {offsets = [0, 16], sizes = [8, 16], strides = [1, 1]} : vector<8x32xf32> to vector<8x16xf32>
    %cst_22 = arith.constant dense<0.000000e+00> : vector<8x16xf32>
    %59 = tpu.matmul %7, %58, %cst_22 {dimension_numbers = #tpu.dot_dimension_numbers<[1], [0], [0], [1], [0, 0, 1, 1], [], []>} : vector<8x8xf32>, vector<8x16xf32>, vector<8x16xf32> -> vector<8x16xf32>
    %60 = math.exp %59 : vector<8x16xf32>
    %61 = vector.extract_strided_slice %60 {offsets = [7, 0], sizes = [1, 16], strides = [1, 1]} : vector<8x16xf32> to vector<1x16xf32>
    %62 = tpu.reciprocal %60 {approx = true} : vector<8x16xf32> -> vector<8x16xf32>
    %63 = vector.extract_strided_slice %13 {offsets = [0, 16], sizes = [8, 16], strides = [1, 1]} : vector<8x32xf32> to vector<8x16xf32>
    %64 = vector.extract_strided_slice %17 {offsets = [0, 16], sizes = [8, 16], strides = [1, 1]} : vector<8x32xf32> to vector<8x16xf32>
    %65 = vector.extract_strided_slice %23 {offsets = [0, 32], sizes = [8, 32], strides = [1, 1]} : vector<8x64xbf16> to vector<8x32xbf16>
    %66 = arith.mulf %63, %60 : vector<8x16xf32>
    %67 = arith.truncf %66 : vector<8x16xf32> to vector<8x16xbf16>
    %68 = arith.mulf %64, %62 : vector<8x16xf32>
    %69 = arith.truncf %68 : vector<8x16xf32> to vector<8x16xbf16>
    %70 = vector.broadcast %61 : vector<1x16xf32> to vector<8x16xf32>
    %71 = arith.mulf %70, %62 : vector<8x16xf32>
    %72 = arith.mulf %64, %71 : vector<8x16xf32>
    %73 = arith.truncf %72 : vector<8x16xf32> to vector<8x16xbf16>
    %c0_23 = arith.constant 0 : index
    %c1 = arith.constant 1 : index
    %c0_24 = arith.constant 0 : index
    %c0_25 = arith.constant 0 : index
    %74 = vector.load %arg8[%c0_23, %c1, %c0_24, %c0_25] : memref<1x2x32x16xf32, #tpu.memory_space<vmem>>, vector<1x1x32x16xf32>
    %75 = vector.shape_cast %74 : vector<1x1x32x16xf32> to vector<32x16xf32>
    %76 = arith.truncf %75 : vector<32x16xf32> to vector<32x16xbf16>
    %cst_26 = arith.constant dense<0.000000e+00> : vector<8x32xf32>
    %77 = tpu.matmul %67, %76, %cst_26 {dimension_numbers = #tpu.dot_dimension_numbers<[1], [1], [0], [0], [0, 0, 1, 0], [], []>} : vector<8x16xbf16>, vector<32x16xbf16>, vector<8x32xf32> -> vector<8x32xf32>
    %cst_27 = arith.constant dense<0.000000e+00> : vector<8x8xf32>
    %78 = tpu.matmul %67, %69, %cst_27 {dimension_numbers = #tpu.dot_dimension_numbers<[1], [1], [0], [0], [0, 0, 1, 0], [], []>} : vector<8x16xbf16>, vector<8x16xbf16>, vector<8x8xf32> -> vector<8x8xf32>
    %79 = arith.mulf %78, %7 : vector<8x8xf32>
    %80 = arith.truncf %79 : vector<8x8xf32> to vector<8x8xbf16>
    %cst_28 = arith.constant dense<0.000000e+00> : vector<8x32xf32>
    %81 = tpu.matmul %80, %65, %cst_28 {dimension_numbers = #tpu.dot_dimension_numbers<[1], [0], [0], [1], [0, 0, 1, 1], [], []>} : vector<8x8xbf16>, vector<8x32xbf16>, vector<8x32xf32> -> vector<8x32xf32>
    %82 = arith.addf %77, %81 : vector<8x32xf32>
    %83 = vector.broadcast %61 : vector<1x16xf32> to vector<32x16xf32>
    %84 = arith.mulf %75, %83 : vector<32x16xf32>
    %cst_29 = arith.constant dense<0.000000e+00> : vector<32x16xf32>
    %85 = tpu.matmul %65, %73, %cst_29 {dimension_numbers = #tpu.dot_dimension_numbers<[0], [0], [1], [1], [0, 1, 1, 1], [], []>} : vector<8x32xbf16>, vector<8x16xbf16>, vector<32x16xf32> -> vector<32x16xf32>
    %86 = arith.addf %84, %85 : vector<32x16xf32>
    %c0_30 = arith.constant 0 : index
    %c1_31 = arith.constant 1 : index
    %c0_32 = arith.constant 0 : index
    %c0_33 = arith.constant 0 : index
    %87 = vector.load %arg8[%c0_30, %c1_31, %c0_32, %c0_33] : memref<1x2x32x16xf32, #tpu.memory_space<vmem>>, vector<1x1x32x16xf32>
    %88 = vector.shape_cast %87 : vector<1x1x32x16xf32> to vector<32x16xf32>
    %89 = vector.shape_cast %86 : vector<32x16xf32> to vector<1x1x32x16xf32>
    tpu.vector_store %arg8[%c0_30, %c1_31, %c0_32, %c0_33], %89 {strides = array<i32>} : memref<1x2x32x16xf32, #tpu.memory_space<vmem>>, vector<1x1x32x16xf32>,
    %90 = arith.index_cast %9 : i32 to index
    %c32 = arith.constant 32 : index
    %91 = vector.load %arg9[%90, %c32] : memref<16x64xf32, #tpu.memory_space<vmem>>, vector<8x32xf32>
    tpu.vector_store %arg9[%90, %c32], %82 {strides = array<i32>} : memref<16x64xf32, #tpu.memory_space<vmem>>, vector<8x32xf32>,
    %c1_i32 = arith.constant 1 : i32
    %c8_i32_34 = arith.constant 8 : i32
    %92 = arith.muli %c1_i32, %c8_i32_34 : i32
    %93 = tpu.assume_multiple %92, 8 : i32
    %c0_35 = arith.constant 0 : index
    %94 = arith.index_cast %93 : i32 to index
    %c0_36 = arith.constant 0 : index
    %95 = vector.load %arg2[%c0_35, %94, %c0_36] : memref<1x16x32xbf16, #tpu.memory_space<vmem>>, vector<1x8x32xbf16>
    %96 = vector.shape_cast %95 : vector<1x8x32xbf16> to vector<8x32xbf16>
    %97 = arith.extf %96 : vector<8x32xbf16> to vector<8x32xf32>
    %c0_37 = arith.constant 0 : index
    %98 = arith.index_cast %93 : i32 to index
    %c0_38 = arith.constant 0 : index
    %99 = vector.load %arg3[%c0_37, %98, %c0_38] : memref<1x16x32xbf16, #tpu.memory_space<vmem>>, vector<1x8x32xbf16>
    %100 = vector.shape_cast %99 : vector<1x8x32xbf16> to vector<8x32xbf16>
    %101 = arith.extf %100 : vector<8x32xbf16> to vector<8x32xf32>
    %c0_39 = arith.constant 0 : index
    %102 = arith.index_cast %93 : i32 to index
    %c0_40 = arith.constant 0 : index
    %103 = vector.load %arg4[%c0_39, %102, %c0_40] : memref<1x16x32xf32, #tpu.memory_space<vmem>>, vector<1x8x32xf32>
    %104 = vector.shape_cast %103 : vector<1x8x32xf32> to vector<8x32xf32>
    %c0_41 = arith.constant 0 : index
    %105 = arith.index_cast %93 : i32 to index
    %c0_42 = arith.constant 0 : index
    %106 = vector.load %arg5[%c0_41, %105, %c0_42] : memref<1x16x64xbf16, #tpu.memory_space<vmem>>, vector<1x8x64xbf16>
    %107 = vector.shape_cast %106 : vector<1x8x64xbf16> to vector<8x64xbf16>
    %108 = vector.extract_strided_slice %104 {offsets = [0, 0], sizes = [8, 16], strides = [1, 1]} : vector<8x32xf32> to vector<8x16xf32>
    %cst_43 = arith.constant dense<0.000000e+00> : vector<8x16xf32>
    %109 = tpu.matmul %7, %108, %cst_43 {dimension_numbers = #tpu.dot_dimension_numbers<[1], [0], [0], [1], [0, 0, 1, 1], [], []>} : vector<8x8xf32>, vector<8x16xf32>, vector<8x16xf32> -> vector<8x16xf32>
    %110 = math.exp %109 : vector<8x16xf32>
    %111 = vector.extract_strided_slice %110 {offsets = [7, 0], sizes = [1, 16], strides = [1, 1]} : vector<8x16xf32> to vector<1x16xf32>
    %112 = tpu.reciprocal %110 {approx = true} : vector<8x16xf32> -> vector<8x16xf32>
    %113 = vector.extract_strided_slice %97 {offsets = [0, 0], sizes = [8, 16], strides = [1, 1]} : vector<8x32xf32> to vector<8x16xf32>
    %114 = vector.extract_strided_slice %101 {offsets = [0, 0], sizes = [8, 16], strides = [1, 1]} : vector<8x32xf32> to vector<8x16xf32>
    %115 = vector.extract_strided_slice %107 {offsets = [0, 0], sizes = [8, 32], strides = [1, 1]} : vector<8x64xbf16> to vector<8x32xbf16>
    %116 = arith.mulf %113, %110 : vector<8x16xf32>
    %117 = arith.truncf %116 : vector<8x16xf32> to vector<8x16xbf16>
    %118 = arith.mulf %114, %112 : vector<8x16xf32>
    %119 = arith.truncf %118 : vector<8x16xf32> to vector<8x16xbf16>
    %120 = vector.broadcast %111 : vector<1x16xf32> to vector<8x16xf32>
    %121 = arith.mulf %120, %112 : vector<8x16xf32>
    %122 = arith.mulf %114, %121 : vector<8x16xf32>
    %123 = arith.truncf %122 : vector<8x16xf32> to vector<8x16xbf16>
    %c0_44 = arith.constant 0 : index
    %c0_45 = arith.constant 0 : index
    %c0_46 = arith.constant 0 : index
    %c0_47 = arith.constant 0 : index
    %124 = vector.load %arg8[%c0_44, %c0_45, %c0_46, %c0_47] : memref<1x2x32x16xf32, #tpu.memory_space<vmem>>, vector<1x1x32x16xf32>
    %125 = vector.shape_cast %124 : vector<1x1x32x16xf32> to vector<32x16xf32>
    %126 = arith.truncf %125 : vector<32x16xf32> to vector<32x16xbf16>
    %cst_48 = arith.constant dense<0.000000e+00> : vector<8x32xf32>
    %127 = tpu.matmul %117, %126, %cst_48 {dimension_numbers = #tpu.dot_dimension_numbers<[1], [1], [0], [0], [0, 0, 1, 0], [], []>} : vector<8x16xbf16>, vector<32x16xbf16>, vector<8x32xf32> -> vector<8x32xf32>
    %cst_49 = arith.constant dense<0.000000e+00> : vector<8x8xf32>
    %128 = tpu.matmul %117, %119, %cst_49 {dimension_numbers = #tpu.dot_dimension_numbers<[1], [1], [0], [0], [0, 0, 1, 0], [], []>} : vector<8x16xbf16>, vector<8x16xbf16>, vector<8x8xf32> -> vector<8x8xf32>
    %129 = arith.mulf %128, %7 : vector<8x8xf32>
    %130 = arith.truncf %129 : vector<8x8xf32> to vector<8x8xbf16>
    %cst_50 = arith.constant dense<0.000000e+00> : vector<8x32xf32>
    %131 = tpu.matmul %130, %115, %cst_50 {dimension_numbers = #tpu.dot_dimension_numbers<[1], [0], [0], [1], [0, 0, 1, 1], [], []>} : vector<8x8xbf16>, vector<8x32xbf16>, vector<8x32xf32> -> vector<8x32xf32>
    %132 = arith.addf %127, %131 : vector<8x32xf32>
    %133 = vector.broadcast %111 : vector<1x16xf32> to vector<32x16xf32>
    %134 = arith.mulf %125, %133 : vector<32x16xf32>
    %cst_51 = arith.constant dense<0.000000e+00> : vector<32x16xf32>
    %135 = tpu.matmul %115, %123, %cst_51 {dimension_numbers = #tpu.dot_dimension_numbers<[0], [0], [1], [1], [0, 1, 1, 1], [], []>} : vector<8x32xbf16>, vector<8x16xbf16>, vector<32x16xf32> -> vector<32x16xf32>
    %136 = arith.addf %134, %135 : vector<32x16xf32>
    %c0_52 = arith.constant 0 : index
    %c0_53 = arith.constant 0 : index
    %c0_54 = arith.constant 0 : index
    %c0_55 = arith.constant 0 : index
    %137 = vector.load %arg8[%c0_52, %c0_53, %c0_54, %c0_55] : memref<1x2x32x16xf32, #tpu.memory_space<vmem>>, vector<1x1x32x16xf32>
    %138 = vector.shape_cast %137 : vector<1x1x32x16xf32> to vector<32x16xf32>
    %139 = vector.shape_cast %136 : vector<32x16xf32> to vector<1x1x32x16xf32>
    tpu.vector_store %arg8[%c0_52, %c0_53, %c0_54, %c0_55], %139 {strides = array<i32>} : memref<1x2x32x16xf32, #tpu.memory_space<vmem>>, vector<1x1x32x16xf32>,
    %140 = arith.index_cast %93 : i32 to index
    %c0_56 = arith.constant 0 : index
    %141 = vector.load %arg9[%140, %c0_56] : memref<16x64xf32, #tpu.memory_space<vmem>>, vector<8x32xf32>
    tpu.vector_store %arg9[%140, %c0_56], %132 {strides = array<i32>} : memref<16x64xf32, #tpu.memory_space<vmem>>, vector<8x32xf32>,
    %142 = vector.extract_strided_slice %104 {offsets = [0, 16], sizes = [8, 16], strides = [1, 1]} : vector<8x32xf32> to vector<8x16xf32>
    %cst_57 = arith.constant dense<0.000000e+00> : vector<8x16xf32>
    %143 = tpu.matmul %7, %142, %cst_57 {dimension_numbers = #tpu.dot_dimension_numbers<[1], [0], [0], [1], [0, 0, 1, 1], [], []>} : vector<8x8xf32>, vector<8x16xf32>, vector<8x16xf32> -> vector<8x16xf32>
    %144 = math.exp %143 : vector<8x16xf32>
    %145 = vector.extract_strided_slice %144 {offsets = [7, 0], sizes = [1, 16], strides = [1, 1]} : vector<8x16xf32> to vector<1x16xf32>
    %146 = tpu.reciprocal %144 {approx = true} : vector<8x16xf32> -> vector<8x16xf32>
    %147 = vector.extract_strided_slice %97 {offsets = [0, 16], sizes = [8, 16], strides = [1, 1]} : vector<8x32xf32> to vector<8x16xf32>
    %148 = vector.extract_strided_slice %101 {offsets = [0, 16], sizes = [8, 16], strides = [1, 1]} : vector<8x32xf32> to vector<8x16xf32>
    %149 = vector.extract_strided_slice %107 {offsets = [0, 32], sizes = [8, 32], strides = [1, 1]} : vector<8x64xbf16> to vector<8x32xbf16>
    %150 = arith.mulf %147, %144 : vector<8x16xf32>
    %151 = arith.truncf %150 : vector<8x16xf32> to vector<8x16xbf16>
    %152 = arith.mulf %148, %146 : vector<8x16xf32>
    %153 = arith.truncf %152 : vector<8x16xf32> to vector<8x16xbf16>
    %154 = vector.broadcast %145 : vector<1x16xf32> to vector<8x16xf32>
    %155 = arith.mulf %154, %146 : vector<8x16xf32>
    %156 = arith.mulf %148, %155 : vector<8x16xf32>
    %157 = arith.truncf %156 : vector<8x16xf32> to vector<8x16xbf16>
    %c0_58 = arith.constant 0 : index
    %c1_59 = arith.constant 1 : index
    %c0_60 = arith.constant 0 : index
    %c0_61 = arith.constant 0 : index
    %158 = vector.load %arg8[%c0_58, %c1_59, %c0_60, %c0_61] : memref<1x2x32x16xf32, #tpu.memory_space<vmem>>, vector<1x1x32x16xf32>
    %159 = vector.shape_cast %158 : vector<1x1x32x16xf32> to vector<32x16xf32>
    %160 = arith.truncf %159 : vector<32x16xf32> to vector<32x16xbf16>
    %cst_62 = arith.constant dense<0.000000e+00> : vector<8x32xf32>
    %161 = tpu.matmul %151, %160, %cst_62 {dimension_numbers = #tpu.dot_dimension_numbers<[1], [1], [0], [0], [0, 0, 1, 0], [], []>} : vector<8x16xbf16>, vector<32x16xbf16>, vector<8x32xf32> -> vector<8x32xf32>
    %cst_63 = arith.constant dense<0.000000e+00> : vector<8x8xf32>
    %162 = tpu.matmul %151, %153, %cst_63 {dimension_numbers = #tpu.dot_dimension_numbers<[1], [1], [0], [0], [0, 0, 1, 0], [], []>} : vector<8x16xbf16>, vector<8x16xbf16>, vector<8x8xf32> -> vector<8x8xf32>
    %163 = arith.mulf %162, %7 : vector<8x8xf32>
    %164 = arith.truncf %163 : vector<8x8xf32> to vector<8x8xbf16>
    %cst_64 = arith.constant dense<0.000000e+00> : vector<8x32xf32>
    %165 = tpu.matmul %164, %149, %cst_64 {dimension_numbers = #tpu.dot_dimension_numbers<[1], [0], [0], [1], [0, 0, 1, 1], [], []>} : vector<8x8xbf16>, vector<8x32xbf16>, vector<8x32xf32> -> vector<8x32xf32>
    %166 = arith.addf %161, %165 : vector<8x32xf32>
    %167 = vector.broadcast %145 : vector<1x16xf32> to vector<32x16xf32>
    %168 = arith.mulf %159, %167 : vector<32x16xf32>
    %cst_65 = arith.constant dense<0.000000e+00> : vector<32x16xf32>
    %169 = tpu.matmul %149, %157, %cst_65 {dimension_numbers = #tpu.dot_dimension_numbers<[0], [0], [1], [1], [0, 1, 1, 1], [], []>} : vector<8x32xbf16>, vector<8x16xbf16>, vector<32x16xf32> -> vector<32x16xf32>
    %170 = arith.addf %168, %169 : vector<32x16xf32>
    %c0_66 = arith.constant 0 : index
    %c1_67 = arith.constant 1 : index
    %c0_68 = arith.constant 0 : index
    %c0_69 = arith.constant 0 : index
    %171 = vector.load %arg8[%c0_66, %c1_67, %c0_68, %c0_69] : memref<1x2x32x16xf32, #tpu.memory_space<vmem>>, vector<1x1x32x16xf32>
    %172 = vector.shape_cast %171 : vector<1x1x32x16xf32> to vector<32x16xf32>
    %173 = vector.shape_cast %170 : vector<32x16xf32> to vector<1x1x32x16xf32>
    tpu.vector_store %arg8[%c0_66, %c1_67, %c0_68, %c0_69], %173 {strides = array<i32>} : memref<1x2x32x16xf32, #tpu.memory_space<vmem>>, vector<1x1x32x16xf32>,
    %174 = arith.index_cast %93 : i32 to index
    %c32_70 = arith.constant 32 : index
    %175 = vector.load %arg9[%174, %c32_70] : memref<16x64xf32, #tpu.memory_space<vmem>>, vector<8x32xf32>
    tpu.vector_store %arg9[%174, %c32_70], %166 {strides = array<i32>} : memref<16x64xf32, #tpu.memory_space<vmem>>, vector<8x32xf32>,
    %c2_i32 = arith.constant 2 : i32
    %c0_71 = arith.constant 0 : index
    %c0_72 = arith.constant 0 : index
    %176 = vector.load %arg9[%c0_71, %c0_72] : memref<16x64xf32, #tpu.memory_space<vmem>>, vector<16x32xf32>
    %cst_73 = arith.constant dense<0.000000e+00> : vector<16xf32>
    %177 = vector.multi_reduction <add>, %176, %cst_73 [1] : vector<16x32xf32> to vector<16xf32>
    %178 = vector.shape_cast %177 : vector<16xf32> to vector<16x1xf32>
    %cst_74 = arith.constant 3.200000e+01 : f32
    %179 = vector.broadcast %cst_74 : f32 to vector<16x1xf32>
    %180 = arith.divf %178, %179 : vector<16x1xf32>
    %181 = vector.broadcast %180 : vector<16x1xf32> to vector<16x32xf32>
    %182 = arith.subf %176, %181 : vector<16x32xf32>
    %183 = arith.mulf %182, %182 : vector<16x32xf32>
    %cst_75 = arith.constant dense<0.000000e+00> : vector<16xf32>
    %184 = vector.multi_reduction <add>, %183, %cst_75 [1] : vector<16x32xf32> to vector<16xf32>
    %185 = vector.shape_cast %184 : vector<16xf32> to vector<16x1xf32>
    %cst_76 = arith.constant 3.200000e+01 : f32
    %186 = vector.broadcast %cst_76 : f32 to vector<16x1xf32>
    %187 = arith.divf %185, %186 : vector<16x1xf32>
    %cst_77 = arith.constant 9.99999974E-6 : f32
    %188 = vector.broadcast %cst_77 : f32 to vector<16x1xf32>
    %189 = arith.addf %187, %188 : vector<16x1xf32>
    %190 = math.rsqrt %189 : vector<16x1xf32>
    %191 = vector.broadcast %190 : vector<16x1xf32> to vector<16x32xf32>
    %192 = arith.mulf %182, %191 : vector<16x32xf32>
    %c0_78 = arith.constant 0 : index
    %c0_79 = arith.constant 0 : index
    %193 = vector.load %arg9[%c0_78, %c0_79] : memref<16x64xf32, #tpu.memory_space<vmem>>, vector<16x32xf32>
    tpu.vector_store %arg9[%c0_78, %c0_79], %192 {strides = array<i32>} : memref<16x64xf32, #tpu.memory_space<vmem>>, vector<16x32xf32>,
    %c0_80 = arith.constant 0 : index
    %c32_81 = arith.constant 32 : index
    %194 = vector.load %arg9[%c0_80, %c32_81] : memref<16x64xf32, #tpu.memory_space<vmem>>, vector<16x32xf32>
    %cst_82 = arith.constant dense<0.000000e+00> : vector<16xf32>
    %195 = vector.multi_reduction <add>, %194, %cst_82 [1] : vector<16x32xf32> to vector<16xf32>
    %196 = vector.shape_cast %195 : vector<16xf32> to vector<16x1xf32>
    %cst_83 = arith.constant 3.200000e+01 : f32
    %197 = vector.broadcast %cst_83 : f32 to vector<16x1xf32>
    %198 = arith.divf %196, %197 : vector<16x1xf32>
    %199 = vector.broadcast %198 : vector<16x1xf32> to vector<16x32xf32>
    %200 = arith.subf %194, %199 : vector<16x32xf32>
    %201 = arith.mulf %200, %200 : vector<16x32xf32>
    %cst_84 = arith.constant dense<0.000000e+00> : vector<16xf32>
    %202 = vector.multi_reduction <add>, %201, %cst_84 [1] : vector<16x32xf32> to vector<16xf32>
    %203 = vector.shape_cast %202 : vector<16xf32> to vector<16x1xf32>
    %cst_85 = arith.constant 3.200000e+01 : f32
    %204 = vector.broadcast %cst_85 : f32 to vector<16x1xf32>
    %205 = arith.divf %203, %204 : vector<16x1xf32>
    %cst_86 = arith.constant 9.99999974E-6 : f32
    %206 = vector.broadcast %cst_86 : f32 to vector<16x1xf32>
    %207 = arith.addf %205, %206 : vector<16x1xf32>
    %208 = math.rsqrt %207 : vector<16x1xf32>
    %209 = vector.broadcast %208 : vector<16x1xf32> to vector<16x32xf32>
    %210 = arith.mulf %200, %209 : vector<16x32xf32>
    %c0_87 = arith.constant 0 : index
    %c32_88 = arith.constant 32 : index
    %211 = vector.load %arg9[%c0_87, %c32_88] : memref<16x64xf32, #tpu.memory_space<vmem>>, vector<16x32xf32>
    tpu.vector_store %arg9[%c0_87, %c32_88], %210 {strides = array<i32>} : memref<16x64xf32, #tpu.memory_space<vmem>>, vector<16x32xf32>,
    %c0_89 = arith.constant 0 : index
    %c0_90 = arith.constant 0 : index
    %c0_91 = arith.constant 0 : index
    %212 = vector.load %arg6[%c0_89, %c0_90, %c0_91] : memref<1x16x64xbf16, #tpu.memory_space<vmem>>, vector<1x16x64xbf16>
    %213 = vector.shape_cast %212 : vector<1x16x64xbf16> to vector<16x64xbf16>
    %214 = arith.extf %213 : vector<16x64xbf16> to vector<16x64xf32>
    %cst_92 = arith.constant 0.000000e+00 : f32
    %215 = vector.broadcast %cst_92 : f32 to vector<16x64xf32>
    %216 = arith.subf %215, %214 : vector<16x64xf32>
    %217 = math.exp %216 : vector<16x64xf32>
    %cst_93 = arith.constant 1.000000e+00 : f32
    %218 = vector.broadcast %cst_93 : f32 to vector<16x64xf32>
    %219 = arith.addf %218, %217 : vector<16x64xf32>
    %cst_94 = arith.constant 1.000000e+00 : f32
    %220 = vector.broadcast %cst_94 : f32 to vector<16x64xf32>
    %221 = arith.divf %220, %219 : vector<16x64xf32>
    %222 = arith.mulf %214, %221 : vector<16x64xf32>
    %c0_95 = arith.constant 0 : index
    %c0_96 = arith.constant 0 : index
    %223 = vector.load %arg9[%c0_95, %c0_96] : memref<16x64xf32, #tpu.memory_space<vmem>>, vector<16x64xf32>
    %224 = arith.mulf %222, %223 : vector<16x64xf32>
    %225 = arith.truncf %224 : vector<16x64xf32> to vector<16x64xbf16>
    %c0_97 = arith.constant 0 : index
    %c0_98 = arith.constant 0 : index
    %c0_99 = arith.constant 0 : index
    %226 = vector.load %arg7[%c0_97, %c0_98, %c0_99] : memref<1x16x64xbf16, #tpu.memory_space<vmem>>, vector<1x16x64xbf16>
    %227 = vector.shape_cast %226 : vector<1x16x64xbf16> to vector<16x64xbf16>
    %228 = vector.shape_cast %225 : vector<16x64xbf16> to vector<1x16x64xbf16>
    tpu.vector_store %arg7[%c0_97, %c0_98, %c0_99], %228 {strides = array<i32>} : memref<1x16x64xbf16, #tpu.memory_space<vmem>>, vector<1x16x64xbf16>,
    return
  }
  func.func @transform_0(%arg0: i32, %arg1: i32) -> (i32, i32, i32) {
    %c0_i32 = arith.constant 0 : i32
    %c0_i32_0 = arith.constant 0 : i32
    return %arg0, %arg1, %c0_i32 : i32, i32, i32
  }
  func.func @transform_1(%arg0: i32, %arg1: i32) -> (i32, i32, i32) {
    %c0_i32 = arith.constant 0 : i32
    %c0_i32_0 = arith.constant 0 : i32
    return %arg0, %arg1, %c0_i32 : i32, i32, i32
  }
  func.func @transform_2(%arg0: i32, %arg1: i32) -> (i32, i32, i32) {
    %c0_i32 = arith.constant 0 : i32
    %c0_i32_0 = arith.constant 0 : i32
    return %arg0, %arg1, %c0_i32 : i32, i32, i32
  }
  func.func @transform_3(%arg0: i32, %arg1: i32) -> (i32, i32, i32) {
    %c0_i32 = arith.constant 0 : i32
    %c0_i32_0 = arith.constant 0 : i32
    return %arg0, %arg1, %c0_i32 : i32, i32, i32
  }
  func.func @transform_4(%arg0: i32, %arg1: i32) -> (i32, i32, i32) {
    %c0_i32 = arith.constant 0 : i32
    %c0_i32_0 = arith.constant 0 : i32
    return %arg0, %arg1, %c0_i32 : i32, i32, i32
  }
  func.func @transform_5(%arg0: i32, %arg1: i32) -> (i32, i32, i32) {
    %c0_i32 = arith.constant 0 : i32
    %c0_i32_0 = arith.constant 0 : i32
    return %arg0, %arg1, %c0_i32 : i32, i32, i32
  }
  func.func @transform_6(%arg0: i32, %arg1: i32) -> (i32, i32, i32, i32) {
    %c0_i32 = arith.constant 0 : i32
    %c0_i32_0 = arith.constant 0 : i32
    %c0_i32_1 = arith.constant 0 : i32
    %c0_i32_2 = arith.constant 0 : i32
    return %arg0, %c0_i32, %c0_i32_0, %c0_i32_1 : i32, i32, i32, i32
  }
}

</mosaic_0001>

<llo_original>
// kernel: gla_forward.1
$region0: #{gla_forward.1}
  #allocation0 [shape = 'u32[]', space=smem, size = 0x4, offset = 0x4, fixed_abs, tag = 'smem constant byte address 0x4 - core index']
  #allocation1 [shape = 'u32[72,128]{1,0:T(1,128)}', space=vmem, size = 0x9000, scoped, tag = 'internal scratch']
  #allocation2 [shape = 'f32[16,64]{1,0:T(8,128)}', space=vmem, size = 0x2000, scoped, tag = 'scratch operand']
  %s0 = inlined_call_operand.vmem [shape: bf16[2,32,32], index: 0, kind: input, shape index: {}]
  %s1 = inlined_call_operand.vmem [shape: bf16[2,32,32], index: 1, kind: input, shape index: {}]
  %s2 = inlined_call_operand.vmem [shape: f32[2,32,32], index: 2, kind: input, shape index: {}]
  %s3 = inlined_call_operand.vmem [shape: bf16[2,32,64], index: 3, kind: input, shape index: {}]
  %s4 = inlined_call_operand.vmem [shape: bf16[2,32,64], index: 4, kind: input, shape index: {}]
  %s5 = inlined_call_operand.vmem [shape: bf16[2,32,64], index: 5, kind: output, shape index: {0}]
  %s6 = inlined_call_operand.vmem [shape: f32[2,2,32,16], index: 6, kind: output, shape index: {1}]
  %7 = xla_tuple %s5, %s6
  %s8 = sld [smem:[#allocation0]]
  $region65: #{gla_forward.1} parent=0
    _
  %s10 = ssub.s32 1, %s8
  %s11 = scalar_select 0, %s10, %s8
  loop: start=0, step=1, limit=6
  $region2: #{gla_forward.1} parent=0 // loop_pre_header
    _
  $region3: #{gla_forward.1} parent=0 // loop_header
    %s13 = sphi 0, %s17
    %p14 = scmp.ge.s32.totalorder %s13, 6
    %s20 = sphi 0, %s32
    %s21 = sphi 0, %s28
    %s22 = sphi 0, %s20
    %s23 = sphi 0, %s21
    %s24 = sphi 0, %s22
    %s25 = sphi 0, %s23
    %s37 = sphi 0, %s39
    %s40 = sphi 0, %s37
    %s41 = sphi 0, %s40
    %s57 = sphi 0, %s41
    %s65 = sphi 0, %s67
    %s68 = sphi 0, %s65
    %s69 = sphi 0, %s68
    %s85 = sphi 0, %s69
    %s93 = sphi 0, %s95
    %s96 = sphi 0, %s93
    %s97 = sphi 0, %s96
    %s113 = sphi 0, %s97
    %s121 = sphi 0, %s123
    %s124 = sphi 0, %s121
    %s125 = sphi 0, %s124
    %s141 = sphi 0, %s125
    %s149 = sphi 0, %s151
    %s152 = sphi 0, %s149
    %s153 = sphi 0, %s152
    %s169 = sphi 0, %s153
    %s177 = sphi 0, %s179
    %s180 = sphi 0, %s177
    %s181 = sphi 0, %s180
    %s197 = sphi 0, %s181
    %s203 = sphi 0, %s205
    %s206 = sphi 0, %s203
    %s207 = sphi 0, %s206
    %s223 = sphi 0, %s207
  $region4: #{gla_forward.1} parent=0 // loop_header_branch
    %16 = sbr.rel (%p14) target = $region8
  $region5: #{gla_forward.1} parent=0 // loop_body
    %s18 = ssub.s32 %s13, 1
    %s19 = ssub.s32 %s13, 2
    %s26 = sadd.s32 1, %s21
    %p27 = scmp.ge.s32.totalorder %s26, 2
    %s28 = scalar_select %p27, 0, %s26
    %s29 = sadd.s32 1, %s20
    %s30 = scalar_select %p27, %s29, %s20
    %p31 = scmp.ge.s32.totalorder %s30, 2
    %s32 = scalar_select %p31, 0, %s30
    %s33 = ssub.s32 %s20, %s32
    %s34 = ssub.s32 %s21, %s28
    %s35 = sor.u32 %s33, %s34
    %p36 = scmp.eq.s32.totalorder %s35, 0
    %s38 = sadd.s32 %s37, 1
    %s39 = scalar_select %p36, %s37, %s38
    %p42 = pneg %p36
    %p43 = scmp.eq.s32.totalorder %s13, 3
    %p44 = por %p42, %p43
    %p45 = scmp.ne.s32.totalorder %s37, %s40
    %p46 = scmp.eq.s32.totalorder %s13, 0
    %p47 = por %p45, %p46
    %p48 = scmp.ne.s32.totalorder %s37, %s40
    %p49 = scmp.eq.s32.totalorder %s18, 3
    %p50 = por %p48, %p49
    %p51 = scmp.ne.s32.totalorder %s40, %s41
    %p52 = scmp.eq.s32.totalorder %s18, 0
    %p53 = por %p51, %p52
    %p54 = scmp.ne.s32.totalorder %s40, %s41
    %p55 = scmp.eq.s32.totalorder %s19, 3
    %p56 = por %p54, %p55
    %p58 = scmp.ne.s32.totalorder %s41, %s57
    %p59 = scmp.eq.s32.totalorder %s19, 0
    %p60 = por %p58, %p59
    %s61 = ssub.s32 %s20, %s32
    %s62 = ssub.s32 %s21, %s28
    %s63 = sor.u32 %s61, %s62
    %p64 = scmp.eq.s32.totalorder %s63, 0
    %s66 = sadd.s32 %s65, 1
    %s67 = scalar_select %p64, %s65, %s66
    %p70 = pneg %p64
    %p71 = scmp.eq.s32.totalorder %s13, 3
    %p72 = por %p70, %p71
    %p73 = scmp.ne.s32.totalorder %s65, %s68
    %p74 = scmp.eq.s32.totalorder %s13, 0
    %p75 = por %p73, %p74
    %p76 = scmp.ne.s32.totalorder %s65, %s68
    %p77 = scmp.eq.s32.totalorder %s18, 3
    %p78 = por %p76, %p77
    %p79 = scmp.ne.s32.totalorder %s68, %s69
    %p80 = scmp.eq.s32.totalorder %s18, 0
    %p81 = por %p79, %p80
    %p82 = scmp.ne.s32.totalorder %s68, %s69
    %p83 = scmp.eq.s32.totalorder %s19, 3
    %p84 = por %p82, %p83
    %p86 = scmp.ne.s32.totalorder %s69, %s85
    %p87 = scmp.eq.s32.totalorder %s19, 0
    %p88 = por %p86, %p87
    %s89 = ssub.s32 %s20, %s32
    %s90 = ssub.s32 %s21, %s28
    %s91 = sor.u32 %s89, %s90
    %p92 = scmp.eq.s32.totalorder %s91, 0
    %s94 = sadd.s32 %s93, 1
    %s95 = scalar_select %p92, %s93, %s94
    %p98 = pneg %p92
    %p99 = scmp.eq.s32.totalorder %s13, 3
    %p100 = por %p98, %p99
    %p101 = scmp.ne.s32.totalorder %s93, %s96
    %p102 = scmp.eq.s32.totalorder %s13, 0
    %p103 = por %p101, %p102
    %p104 = scmp.ne.s32.totalorder %s93, %s96
    %p105 = scmp.eq.s32.totalorder %s18, 3
    %p106 = por %p104, %p105
    %p107 = scmp.ne.s32.totalorder %s96, %s97
    %p108 = scmp.eq.s32.totalorder %s18, 0
    %p109 = por %p107, %p108
    %p110 = scmp.ne.s32.totalorder %s96, %s97
    %p111 = scmp.eq.s32.totalorder %s19, 3
    %p112 = por %p110, %p111
    %p114 = scmp.ne.s32.totalorder %s97, %s113
    %p115 = scmp.eq.s32.totalorder %s19, 0
    %p116 = por %p114, %p115
    %s117 = ssub.s32 %s20, %s32
    %s118 = ssub.s32 %s21, %s28
    %s119 = sor.u32 %s117, %s118
    %p120 = scmp.eq.s32.totalorder %s119, 0
    %s122 = sadd.s32 %s121, 1
    %s123 = scalar_select %p120, %s121, %s122
    %p126 = pneg %p120
    %p127 = scmp.eq.s32.totalorder %s13, 3
    %p128 = por %p126, %p127
    %p129 = scmp.ne.s32.totalorder %s121, %s124
    %p130 = scmp.eq.s32.totalorder %s13, 0
    %p131 = por %p129, %p130
    %p132 = scmp.ne.s32.totalorder %s121, %s124
    %p133 = scmp.eq.s32.totalorder %s18, 3
    %p134 = por %p132, %p133
    %p135 = scmp.ne.s32.totalorder %s124, %s125
    %p136 = scmp.eq.s32.totalorder %s18, 0
    %p137 = por %p135, %p136
    %p138 = scmp.ne.s32.totalorder %s124, %s125
    %p139 = scmp.eq.s32.totalorder %s19, 3
    %p140 = por %p138, %p139
    %p142 = scmp.ne.s32.totalorder %s125, %s141
    %p143 = scmp.eq.s32.totalorder %s19, 0
    %p144 = por %p142, %p143
    %s145 = ssub.s32 %s20, %s32
    %s146 = ssub.s32 %s21, %s28
    %s147 = sor.u32 %s145, %s146
    %p148 = scmp.eq.s32.totalorder %s147, 0
    %s150 = sadd.s32 %s149, 1
    %s151 = scalar_select %p148, %s149, %s150
    %p154 = pneg %p148
    %p155 = scmp.eq.s32.totalorder %s13, 3
    %p156 = por %p154, %p155
    %p157 = scmp.ne.s32.totalorder %s149, %s152
    %p158 = scmp.eq.s32.totalorder %s13, 0
    %p159 = por %p157, %p158
    %p160 = scmp.ne.s32.totalorder %s149, %s152
    %p161 = scmp.eq.s32.totalorder %s18, 3
    %p162 = por %p160, %p161
    %p163 = scmp.ne.s32.totalorder %s152, %s153
    %p164 = scmp.eq.s32.totalorder %s18, 0
    %p165 = por %p163, %p164
    %p166 = scmp.ne.s32.totalorder %s152, %s153
    %p167 = scmp.eq.s32.totalorder %s19, 3
    %p168 = por %p166, %p167
    %p170 = scmp.ne.s32.totalorder %s153, %s169
    %p171 = scmp.eq.s32.totalorder %s19, 0
    %p172 = por %p170, %p171
    %s173 = ssub.s32 %s20, %s32
    %s174 = ssub.s32 %s21, %s28
    %s175 = sor.u32 %s173, %s174
    %p176 = scmp.eq.s32.totalorder %s175, 0
    %s178 = sadd.s32 %s177, 1
    %s179 = scalar_select %p176, %s177, %s178
    %p182 = pneg %p176
    %p183 = scmp.eq.s32.totalorder %s13, 3
    %p184 = por %p182, %p183
    %p185 = scmp.ne.s32.totalorder %s177, %s180
    %p186 = scmp.eq.s32.totalorder %s13, 0
    %p187 = por %p185, %p186
    %p188 = scmp.ne.s32.totalorder %s177, %s180
    %p189 = scmp.eq.s32.totalorder %s18, 3
    %p190 = por %p188, %p189
    %p191 = scmp.ne.s32.totalorder %s180, %s181
    %p192 = scmp.eq.s32.totalorder %s18, 0
    %p193 = por %p191, %p192
    %p194 = scmp.ne.s32.totalorder %s180, %s181
    %p195 = scmp.eq.s32.totalorder %s19, 3
    %p196 = por %p194, %p195
    %p198 = scmp.ne.s32.totalorder %s181, %s197
    %p199 = scmp.eq.s32.totalorder %s19, 0
    %p200 = por %p198, %p199
    %s201 = ssub.s32 %s20, %s32
    %p202 = scmp.eq.s32.totalorder %s201, 0
    %s204 = sadd.s32 %s203, 1
    %s205 = scalar_select %p202, %s203, %s204
    %p208 = pneg %p202
    %p209 = scmp.eq.s32.totalorder %s13, 3
    %p210 = por %p208, %p209
    %p211 = scmp.ne.s32.totalorder %s203, %s206
    %p212 = scmp.eq.s32.totalorder %s13, 0
    %p213 = por %p211, %p212
    %p214 = scmp.ne.s32.totalorder %s203, %s206
    %p215 = scmp.eq.s32.totalorder %s18, 3
    %p216 = por %p214, %p215
    %p217 = scmp.ne.s32.totalorder %s206, %s207
    %p218 = scmp.eq.s32.totalorder %s18, 0
    %p219 = por %p217, %p218
    %p220 = scmp.ne.s32.totalorder %s206, %s207
    %p221 = scmp.eq.s32.totalorder %s19, 3
    %p222 = por %p220, %p221
    %p224 = scmp.ne.s32.totalorder %s207, %s223
    %p225 = scmp.eq.s32.totalorder %s19, 0
    %p226 = por %p224, %p225
    %p227 = scmp.le.s32.totalorder 1, %s13
    %p228 = scmp.lt.s32.totalorder %s13, 5
    %p229 = pnand %p227, %p228
    %p230 = pneg %p229
    // Predicated region
    $region9: #{gla_forward.1} parent=5 // pred_check
      _
    $region10: #{gla_forward.1} parent=5 // pred_check_branch
      %232 = sbr.rel (%p229) target = $region12
    $region11: #{gla_forward.1} parent=5 // pred_region
      %s233 = ssub.s32 %s13, 1
    $region12: #{gla_forward.1} parent=5 // pred_fallthru
      _
    %p234 = scmp.lt.s32.totalorder %s13, 4
    // Predicated region
    $region13: #{gla_forward.1} parent=5 // pred_check
      %p235 = pneg %p234
    $region14: #{gla_forward.1} parent=5 // pred_check_branch
      %237 = sbr.rel (%p235) target = $region16
    $region15: #{gla_forward.1} parent=5 // pred_region
      // Predicated region
      $region17: #{gla_forward.1} parent=15 // pred_check
        %p238 = pneg %p47
      $region18: #{gla_forward.1} parent=15 // pred_check_branch
        %240 = sbr.rel (%p238) target = $region20
      $region19: #{gla_forward.1} parent=15 // pred_region
        %s241 = smul.u32 2, %s21
        %p242 = scmp.lt.s32.totalorder %s20, 1
        %s243 = scalar_select %p242, %s20, 1
        %p244 = scmp.lt.s32.totalorder %s241, 3
        %s245 = scalar_select %p244, %s241, 3
        %s246 = smul.addr %s243, 4
        %s247 = sadd.s32 %s245, %s246
        %s248 = smul.addr %s247, 4
        %s249 = scalar_lea.vmem %s0, %s248
        %s250 = smul.u32 2, %s21
      $region20: #{gla_forward.1} parent=15 // pred_fallthru
        _
      // Predicated region
      $region21: #{gla_forward.1} parent=15 // pred_check
        %p251 = pneg %p75
      $region22: #{gla_forward.1} parent=15 // pred_check_branch
        %253 = sbr.rel (%p251) target = $region24
      $region23: #{gla_forward.1} parent=15 // pred_region
        %s254 = smul.u32 2, %s21
        %p255 = scmp.lt.s32.totalorder %s20, 1
        %s256 = scalar_select %p255, %s20, 1
        %p257 = scmp.lt.s32.totalorder %s254, 3
        %s258 = scalar_select %p257, %s254, 3
        %s259 = smul.addr %s256, 4
        %s260 = sadd.s32 %s258, %s259
        %s261 = smul.addr %s260, 4
        %s262 = scalar_lea.vmem %s1, %s261
        %s263 = smul.u32 2, %s21
      $region24: #{gla_forward.1} parent=15 // pred_fallthru
        _
      // Predicated region
      $region25: #{gla_forward.1} parent=15 // pred_check
        %p264 = pneg %p103
      $region26: #{gla_forward.1} parent=15 // pred_check_branch
        %266 = sbr.rel (%p264) target = $region28
      $region27: #{gla_forward.1} parent=15 // pred_region
        %s267 = smul.u32 2, %s21
        %p268 = scmp.lt.s32.totalorder %s20, 1
        %s269 = scalar_select %p268, %s20, 1
        %p270 = scmp.lt.s32.totalorder %s267, 3
        %s271 = scalar_select %p270, %s267, 3
        %s272 = smul.addr %s269, 4
        %s273 = sadd.s32 %s271, %s272
        %s274 = smul.addr %s273, 8
        %s275 = scalar_lea.vmem %s2, %s274
        %s276 = smul.u32 2, %s21
      $region28: #{gla_forward.1} parent=15 // pred_fallthru
        _
      // Predicated region
      $region29: #{gla_forward.1} parent=15 // pred_check
        %p277 = pneg %p131
      $region30: #{gla_forward.1} parent=15 // pred_check_branch
        %279 = sbr.rel (%p277) target = $region32
      $region31: #{gla_forward.1} parent=15 // pred_region
        %s280 = smul.u32 2, %s21
        %p281 = scmp.lt.s32.totalorder %s20, 1
        %s282 = scalar_select %p281, %s20, 1
        %p283 = scmp.lt.s32.totalorder %s280, 3
        %s284 = scalar_select %p283, %s280, 3
        %s285 = smul.addr %s282, 4
        %s286 = sadd.s32 %s284, %s285
        %s287 = smul.addr %s286, 4
        %s288 = scalar_lea.vmem %s3, %s287
        %s289 = smul.u32 2, %s21
      $region32: #{gla_forward.1} parent=15 // pred_fallthru
        _
      // Predicated region
      $region33: #{gla_forward.1} parent=15 // pred_check
        %p290 = pneg %p159
      $region34: #{gla_forward.1} parent=15 // pred_check_branch
        %292 = sbr.rel (%p290) target = $region36
      $region35: #{gla_forward.1} parent=15 // pred_region
        %s293 = smul.u32 2, %s21
        %p294 = scmp.lt.s32.totalorder %s20, 1
        %s295 = scalar_select %p294, %s20, 1
        %p296 = scmp.lt.s32.totalorder %s293, 3
        %s297 = scalar_select %p296, %s293, 3
        %s298 = smul.addr %s295, 4
        %s299 = sadd.s32 %s297, %s298
        %s300 = smul.addr %s299, 4
        %s301 = scalar_lea.vmem %s4, %s300
        %s302 = smul.u32 2, %s21
      $region36: #{gla_forward.1} parent=15 // pred_fallthru
        _
    $region16: #{gla_forward.1} parent=5 // pred_fallthru
      _
    %p303 = scmp.le.s32.totalorder 1, %s13
    %p304 = scmp.lt.s32.totalorder %s13, 5
    %p305 = pnand %p303, %p304
    %p306 = pneg %p305
    // Predicated region
    $region37: #{gla_forward.1} parent=5 // pred_check
      _
    $region38: #{gla_forward.1} parent=5 // pred_check_branch
      %308 = sbr.rel (%p305) target = $region40
    $region39: #{gla_forward.1} parent=5 // pred_region
      %s309 = ssub.s32 %s13, 1
      %s310 = smul.u32 2, %s23
      %p311 = scmp.lt.s32.totalorder %s22, 1
      %s312 = scalar_select %p311, %s22, 1
      %p313 = scmp.lt.s32.totalorder %s310, 3
      %s314 = scalar_select %p313, %s310, 3
      %s315 = smul.addr %s312, 4
      %s316 = sadd.s32 %s314, %s315
      %s317 = smul.addr %s316, 4
      %s318 = scalar_lea.vmem %s0, %s317
      %p319 = pneg %p53
      %p320 = pneg %p50
      %s321 = smul.u32 2, %s23
      %p322 = scmp.lt.s32.totalorder %s22, 1
      %s323 = scalar_select %p322, %s22, 1
      %p324 = scmp.lt.s32.totalorder %s321, 3
      %s325 = scalar_select %p324, %s321, 3
      %s326 = smul.addr %s323, 4
      %s327 = sadd.s32 %s325, %s326
      %s328 = smul.addr %s327, 4
      %s329 = scalar_lea.vmem %s1, %s328
      %p330 = pneg %p81
      %p331 = pneg %p78
      %s332 = smul.u32 2, %s23
      %p333 = scmp.lt.s32.totalorder %s22, 1
      %s334 = scalar_select %p333, %s22, 1
      %p335 = scmp.lt.s32.totalorder %s332, 3
      %s336 = scalar_select %p335, %s332, 3
      %s337 = smul.addr %s334, 4
      %s338 = sadd.s32 %s336, %s337
      %s339 = smul.addr %s338, 8
      %s340 = scalar_lea.vmem %s2, %s339
      %p341 = pneg %p109
      %p342 = pneg %p106
      %s343 = smul.u32 2, %s23
      %p344 = scmp.lt.s32.totalorder %s22, 1
      %s345 = scalar_select %p344, %s22, 1
      %p346 = scmp.lt.s32.totalorder %s343, 3
      %s347 = scalar_select %p346, %s343, 3
      %s348 = smul.addr %s345, 4
      %s349 = sadd.s32 %s347, %s348
      %s350 = smul.addr %s349, 4
      %s351 = scalar_lea.vmem %s3, %s350
      %p352 = pneg %p137
      %p353 = pneg %p134
      %s354 = smul.u32 2, %s23
      %p355 = scmp.lt.s32.totalorder %s22, 1
      %s356 = scalar_select %p355, %s22, 1
      %p357 = scmp.lt.s32.totalorder %s354, 3
      %s358 = scalar_select %p357, %s354, 3
      %s359 = smul.addr %s356, 4
      %s360 = sadd.s32 %s358, %s359
      %s361 = smul.addr %s360, 4
      %s362 = scalar_lea.vmem %s4, %s361
      %p363 = pneg %p165
      %p364 = pneg %p162
      %p365 = pneg %p193
      %p366 = pneg %p190
      %s367 = smul.u32 2, %s23
      %p368 = scmp.lt.s32.totalorder %s22, 1
      %s369 = scalar_select %p368, %s22, 1
      %p370 = scmp.lt.s32.totalorder %s367, 3
      %s371 = scalar_select %p370, %s367, 3
      %s372 = smul.addr %s369, 4
      %s373 = sadd.s32 %s371, %s372
      %s374 = smul.addr %s373, 4
      %s375 = scalar_lea.vmem %s5, %s374
      %p376 = pneg %p219
      %p377 = pneg %p216
      %p378 = scmp.lt.s32.totalorder %s22, 1
      %s379 = scalar_select %p378, %s22, 1
      %s380 = smul.addr %s379, 8
      %s381 = smul.addr %s380, 8
      %s382 = scalar_lea.vmem %s6, %s381
      %s383 = smul.u32 2, %s23
      %p384 = scmp.lt.s32.totalorder %s22, 1
      %s385 = scalar_select %p384, %s22, 1
      %p386 = scmp.lt.s32.totalorder %s383, 3
      %s387 = scalar_select %p386, %s383, 3
      %s388 = smul.addr %s385, 4
      %s389 = sadd.s32 %s387, %s388
      %s390 = smul.addr %s389, 4
      %s391 = scalar_lea.vmem %s0, %s390
      %s392 = smul.u32 2, %s23
      %s393 = smul.u32 2, %s23
      %p394 = scmp.lt.s32.totalorder %s22, 1
      %s395 = scalar_select %p394, %s22, 1
      %p396 = scmp.lt.s32.totalorder %s393, 3
      %s397 = scalar_select %p396, %s393, 3
      %s398 = smul.addr %s395, 4
      %s399 = sadd.s32 %s397, %s398
      %s400 = smul.addr %s399, 4
      %s401 = scalar_lea.vmem %s1, %s400
      %s402 = smul.u32 2, %s23
      %s403 = smul.u32 2, %s23
      %p404 = scmp.lt.s32.totalorder %s22, 1
      %s405 = scalar_select %p404, %s22, 1
      %p406 = scmp.lt.s32.totalorder %s403, 3
      %s407 = scalar_select %p406, %s403, 3
      %s408 = smul.addr %s405, 4
      %s409 = sadd.s32 %s407, %s408
      %s410 = smul.addr %s409, 8
      %s411 = scalar_lea.vmem %s2, %s410
      %s412 = smul.u32 2, %s23
      %s413 = smul.u32 2, %s23
      %p414 = scmp.lt.s32.totalorder %s22, 1
      %s415 = scalar_select %p414, %s22, 1
      %p416 = scmp.lt.s32.totalorder %s413, 3
      %s417 = scalar_select %p416, %s413, 3
      %s418 = smul.addr %s415, 4
      %s419 = sadd.s32 %s417, %s418
      %s420 = smul.addr %s419, 4
      %s421 = scalar_lea.vmem %s3, %s420
      %s422 = smul.u32 2, %s23
      %s423 = smul.u32 2, %s23
      %p424 = scmp.lt.s32.totalorder %s22, 1
      %s425 = scalar_select %p424, %s22, 1
      %p426 = scmp.lt.s32.totalorder %s423, 3
      %s427 = scalar_select %p426, %s423, 3
      %s428 = smul.addr %s425, 4
      %s429 = sadd.s32 %s427, %s428
      %s430 = smul.addr %s429, 4
      %s431 = scalar_lea.vmem %s4, %s430
      %s432 = smul.u32 2, %s23
      %s433 = smul.u32 2, %s23
      %p434 = scmp.lt.s32.totalorder %s22, 1
      %s435 = scalar_select %p434, %s22, 1
      %p436 = scmp.lt.s32.totalorder %s433, 3
      %s437 = scalar_select %p436, %s433, 3
      %s438 = smul.addr %s435, 4
      %s439 = sadd.s32 %s437, %s438
      %s440 = smul.addr %s439, 4
      %s441 = scalar_lea.vmem %s5, %s440
      %s442 = smul.u32 2, %s23
      %p443 = scmp.lt.s32.totalorder %s22, 1
      %s444 = scalar_select %p443, %s22, 1
      %s445 = smul.addr %s444, 8
      %s446 = smul.addr %s445, 8
      %s447 = scalar_lea.vmem %s6, %s446
      %p449 = scmp.eq.s32.totalorder %s23, 0
      // Predicated region
      $region41: #{gla_forward.1} parent=39 // pred_check
        %p450 = pneg %p449
      $region42: #{gla_forward.1} parent=39 // pred_check_branch
        %452 = sbr.rel (%p450) target = $region44
      $region43: #{gla_forward.1} parent=39 // pred_region
        %vm453 = vcmask 130048
        %454 = vst.msk [vmem:[%s447] sm:$0xff] %vm453, 0.0
        %455 = vst.msk [vmem:[%s447 + $0x8] sm:$0xff] %vm453, 0.0
        %456 = vst.msk [vmem:[%s447 + $0x10] sm:$0xff] %vm453, 0.0
        %457 = vst.msk [vmem:[%s447 + $0x18] sm:$0xff] %vm453, 0.0
        %458 = vst.msk [vmem:[%s447 + $0x20] sm:$0xff] %vm453, 0.0
        %459 = vst.msk [vmem:[%s447 + $0x28] sm:$0xff] %vm453, 0.0
        %460 = vst.msk [vmem:[%s447 + $0x30] sm:$0xff] %vm453, 0.0
        %461 = vst.msk [vmem:[%s447 + $0x38] sm:$0xff] %vm453, 0.0
      $region44: #{gla_forward.1} parent=39 // pred_fallthru
        _
      %v462 = vlaneseq
      %v463 = vshrl.u32 %v462, 7
      %v464 = vlaneseq
      %v465 = vand.u32 %v464, 127
      %vm466 = vcmp.ge.s32.totalorder %v463, %v465
      %v467 = vsel %vm466, 1, 0
      %v468 = vcvt.s32.f32 %v467
      %v469 = vld [vmem:[%s391] sm:$0xf]
      %v470 = vunpack.c.l.bf16 %v469
      %v471 = vld [vmem:[%s401] sm:$0xf]
      %v472 = vunpack.c.l.bf16 %v471
      %v473 = vld [vmem:[%s411] sm:$0xff]
      %v474 = vld [vmem:[%s421] sm:$0xf]
      %vm475 = vcmask 64512
      %v477 = vsel %vm475, %v468, 0
      %479 = vmatpush.msra.mxu0 0.0
      %480 = vmatpush.msra.mxu0 0.0
      %481 = vmatpush.msra.mxu0 0.0
      %482 = vmatpush.msra.mxu0 0.0
      %483 = vmatpush.msra.mxu0 0.0
      %484 = vmatpush.msra.mxu0 0.0
      %485 = vmatpush.msra.mxu0 0.0
      %486 = vmatpush.msra.mxu0 0.0
      %487 = vmatpush.msra.mxu0 0.0
      %488 = vmatpush.msra.mxu0 0.0
      %489 = vmatpush.msra.mxu0 0.0
      %490 = vmatpush.msra.mxu0 0.0
      %491 = vmatpush.msra.mxu0 0.0
      %492 = vmatpush.msra.mxu0 0.0
      %493 = vmatpush.msra.mxu0 0.0
      %494 = vmatpush.msra.mxu0 %v473
      %495 = vmatmul.f32.gmra.mxu0 %v477
      %v496 = vpop.f32.mrf.mxu0
      %v497 = vadd.f32 0.0, %v496
      %498 = vdwg.mxu0
      %v499 = vmul.f32 %v497, 1.442695
      %v500 = vpow.pop %v499
      %v501 = vrcp.pop %v500
      %v502 = vmul.f32 %v470, %v500
      %v503 = vpack.c.bf16 %v502, %v502
      %v504 = vmul.f32 %v472, %v501
      %v505 = vpack.c.bf16 %v504, %v504
      %v506 = vperm.slane %v500, 7
      %v507 = vmul.f32 %v506, %v501
      %v508 = vmul.f32 %v472, %v507
      %v509 = vpack.c.bf16 %v508, %v508
      %v510 = vld [vmem:[%s447] sm:$0xff]
      %v511 = vld [vmem:[%s447 + $0x8] sm:$0xff]
      %v512 = vld [vmem:[%s447 + $0x10] sm:$0xff]
      %v513 = vld [vmem:[%s447 + $0x18] sm:$0xff]
      %v514 = vpack.c.bf16 %v511, %v510
      %v515 = vpack.c.bf16 %v513, %v512
      %vm516 = vcmask 130048
      %v518 = vsel %vm516, %v503, 0
      %v521 = vsel %vm516, %v505, 0
      %523 = vmatpush.bf16.xpose.msra.mxu0 0
      %524 = vmatpush.bf16.xpose.msra.mxu0 0
      %525 = vmatpush.bf16.xpose.msra.mxu0 0
      %526 = vmatpush.bf16.xpose.msra.mxu0 0
      %527 = vmatpush.bf16.xpose.msra.mxu0 0
      %528 = vmatpush.bf16.xpose.msra.mxu0 0
      %529 = vmatpush.bf16.xpose.msra.mxu0 0
      %530 = vmatpush.bf16.xpose.msra.mxu0 %v521
      %531 = vmatmul.bf16.gmra.mxu0 %v518
      %v532 = vpop.f32.mrf.mxu0
      %v533 = vadd.f32 0.0, %v532
      %v534 = vpop.f32.mrf.mxu0
      %535 = vdwg.mxu0
      %v536 = vmul.f32 %v533, %v468
      %v537 = vpack.c.bf16 %v536, %v536
      %v539 = vsel %vm475, %v537, 0
      %vm541 = vcmask 1043456
      %v543 = vsel %vm541, %v474, 0
      %545 = vmatpush.bf16.msra.mxu0 0
      %546 = vmatpush.bf16.msra.mxu0 0
      %547 = vmatpush.bf16.msra.mxu0 0
      %548 = vmatpush.bf16.msra.mxu0 0
      %549 = vmatpush.bf16.msra.mxu0 0
      %550 = vmatpush.bf16.msra.mxu0 0
      %551 = vmatpush.bf16.msra.mxu0 0
      %552 = vmatpush.bf16.msra.mxu0 %v543
      %553 = vmatmul.bf16.gmra.mxu0 %v539
      %v554 = vpop.f32.mrf.mxu0
      %v555 = vadd.f32 0.0, %v554
      %v556 = vpop.f32.mrf.mxu0
      %557 = vdwg.mxu0
      %v559 = vsel %vm516, %v514, 0
      %v562 = vsel %vm516, %v515, 0
      %564 = vmatpush.bf16.xpose.msra.mxu0 0
      %565 = vmatpush.bf16.xpose.msra.mxu0 0
      %566 = vmatpush.bf16.xpose.msra.mxu0 0
      %567 = vmatpush.bf16.xpose.msra.mxu0 0
      %568 = vmatpush.bf16.xpose.msra.mxu0 0
      %569 = vmatpush.bf16.xpose.msra.mxu0 0
      %570 = vmatpush.bf16.xpose.msra.mxu0 %v562
      %571 = vmatpush.bf16.xpose.msra.mxu0 %v559
      %572 = vmatmul.bf16.gmra.mxu0 %v518
      %v573 = vpop.f32.mrf.mxu0
      %v574 = vadd.f32 %v555, %v573
      %v575 = vpop.f32.mrf.mxu0
      %576 = vdwg.mxu0
      %v577 = vmul.f32 %v510, %v506
      %v578 = vmul.f32 %v511, %v506
      %v579 = vmul.f32 %v512, %v506
      %v580 = vmul.f32 %v513, %v506
      %581 = vxpose.xlu0.c.b16.start [1/8] %v474, 128
      %582 = vxpose.xlu0.c.b16.cont [2/8] 0, 128
      %583 = vxpose.xlu0.c.b16.cont [3/8] 0, 128
      %584 = vxpose.xlu0.c.b16.cont [4/8] 0, 128
      %585 = vxpose.xlu0.c.b16.cont [5/8] 0, 128
      %586 = vxpose.xlu0.c.b16.cont [6/8] 0, 128
      %587 = vxpose.xlu0.c.b16.cont [7/8] 0, 128
      %588 = vxpose.xlu0.c.b16.end [8/8] 0, 128
      %v589 = vpop.trf.xlu0
      %v590 = vpop.trf.xlu0
      %v591 = vpop.trf.xlu0
      %v592 = vpop.trf.xlu0
      %v593 = vpop.trf.xlu0
      %v594 = vpop.trf.xlu0
      %v595 = vpop.trf.xlu0
      %v596 = vpop.trf.xlu0
      %v598 = vsel %vm475, %v589, 0
      %v601 = vsel %vm475, %v590, 0
      %v604 = vsel %vm541, %v509, 0
      %606 = vmatpush.bf16.msra.mxu0 0
      %607 = vmatpush.bf16.msra.mxu0 0
      %608 = vmatpush.bf16.msra.mxu0 0
      %609 = vmatpush.bf16.msra.mxu0 0
      %610 = vmatpush.bf16.msra.mxu0 0
      %611 = vmatpush.bf16.msra.mxu0 0
      %612 = vmatpush.bf16.msra.mxu0 0
      %613 = vmatpush.bf16.msra.mxu0 %v604
      %614 = vmatmul.bf16.gmra.mxu0 %v598
      %v615 = vpop.f32.mrf.mxu0
      %v616 = vadd.f32 0.0, %v615
      %v617 = vpop.f32.mrf.mxu0
      %v618 = vadd.f32 0.0, %v617
      %619 = vmatmul.bf16.gmra.mxu0 %v601
      %v620 = vpop.f32.mrf.mxu0
      %v621 = vadd.f32 0.0, %v620
      %v622 = vpop.f32.mrf.mxu0
      %v623 = vadd.f32 0.0, %v622
      %624 = vdwg.mxu0
      %v625 = vadd.f32 %v577, %v616
      %v626 = vadd.f32 %v578, %v618
      %v627 = vadd.f32 %v579, %v621
      %v628 = vadd.f32 %v580, %v623
      %629 = vst.msk [vmem:[%s447] sm:$0xff] %vm516, %v625
      %630 = vst.msk [vmem:[%s447 + $0x8] sm:$0xff] %vm516, %v626
      %631 = vst.msk [vmem:[%s447 + $0x10] sm:$0xff] %vm516, %v627
      %632 = vst.msk [vmem:[%s447 + $0x18] sm:$0xff] %vm516, %v628
      %vm633 = vcmask 261120
      %634 = vst.msk [vmem:[#allocation2] sm:$0xff] %vm633, %v574
      %636 = vrot.lane.b32.xlu0 %v473, 112
      %v637 = vpop.permute.xlu0 %636
      %639 = vmatpush.msra.mxu0 0.0
      %640 = vmatpush.msra.mxu0 0.0
      %641 = vmatpush.msra.mxu0 0.0
      %642 = vmatpush.msra.mxu0 0.0
      %643 = vmatpush.msra.mxu0 0.0
      %644 = vmatpush.msra.mxu0 0.0
      %645 = vmatpush.msra.mxu0 0.0
      %646 = vmatpush.msra.mxu0 0.0
      %647 = vmatpush.msra.mxu0 0.0
      %648 = vmatpush.msra.mxu0 0.0
      %649 = vmatpush.msra.mxu0 0.0
      %650 = vmatpush.msra.mxu0 0.0
      %651 = vmatpush.msra.mxu0 0.0
      %652 = vmatpush.msra.mxu0 0.0
      %653 = vmatpush.msra.mxu0 0.0
      %654 = vmatpush.msra.mxu0 %v637
      %655 = vmatmul.f32.gmra.mxu0 %v477
      %v656 = vpop.f32.mrf.mxu0
      %v657 = vadd.f32 0.0, %v656
      %658 = vdwg.mxu0
      %v659 = vmul.f32 %v657, 1.442695
      %v660 = vpow.pop %v659
      %v661 = vrcp.pop %v660
      %663 = vrot.lane.b32.xlu0 %v660, 16
      %v664 = vpop.permute.xlu0 %663
      %v666 = vmul.f32 %v470, %v664
      %v667 = vpack.c.bf16 %v666, %v666
      %669 = vrot.lane.b32.xlu0 %v661, 16
      %v670 = vpop.permute.xlu0 %669
      %v672 = vmul.f32 %v472, %v670
      %v673 = vpack.c.bf16 %v672, %v672
      %v674 = vperm.slane %v660, 7
      %v675 = vmul.f32 %v674, %v661
      %677 = vrot.lane.b32.xlu0 %v675, 16
      %v678 = vpop.permute.xlu0 %677
      %v680 = vmul.f32 %v472, %v678
      %v681 = vpack.c.bf16 %v680, %v680
      %s682 = scalar_lea.vmem %s447, 32
      %v683 = vld [vmem:[%s682] sm:$0xff]
      %v684 = vld [vmem:[%s682 + $0x8] sm:$0xff]
      %v685 = vld [vmem:[%s682 + $0x10] sm:$0xff]
      %v686 = vld [vmem:[%s682 + $0x18] sm:$0xff]
      %v687 = vpack.c.bf16 %v684, %v683
      %v688 = vpack.c.bf16 %v686, %v685
      %690 = vrot.lane.b32.xlu0 %v667, 112
      %v691 = vpop.permute.xlu0 %690
      %693 = vrot.lane.b32.xlu0 %v673, 112
      %v694 = vpop.permute.xlu0 %693
      %v696 = vsel %vm516, %v691, 0
      %v699 = vsel %vm516, %v694, 0
      %701 = vmatpush.bf16.xpose.msra.mxu0 0
      %702 = vmatpush.bf16.xpose.msra.mxu0 0
      %703 = vmatpush.bf16.xpose.msra.mxu0 0
      %704 = vmatpush.bf16.xpose.msra.mxu0 0
      %705 = vmatpush.bf16.xpose.msra.mxu0 0
      %706 = vmatpush.bf16.xpose.msra.mxu0 0
      %707 = vmatpush.bf16.xpose.msra.mxu0 0
      %708 = vmatpush.bf16.xpose.msra.mxu0 %v699
      %709 = vmatmul.bf16.gmra.mxu0 %v696
      %v710 = vpop.f32.mrf.mxu0
      %v711 = vadd.f32 0.0, %v710
      %v712 = vpop.f32.mrf.mxu0
      %713 = vdwg.mxu0
      %v714 = vmul.f32 %v711, %v468
      %v715 = vpack.c.bf16 %v714, %v714
      %v717 = vunpack.c.l.b16 %v474
      %v718 = vpack.c.b16 %v717, %v717
      %719 = vrot.lane.b32.xlu0 %v718, 96
      %v720 = vpop.permute.xlu0 %719
      %v722 = vsel %vm475, %v715, 0
      %v725 = vsel %vm541, %v720, 0
      %727 = vmatpush.bf16.msra.mxu0 0
      %728 = vmatpush.bf16.msra.mxu0 0
      %729 = vmatpush.bf16.msra.mxu0 0
      %730 = vmatpush.bf16.msra.mxu0 0
      %731 = vmatpush.bf16.msra.mxu0 0
      %732 = vmatpush.bf16.msra.mxu0 0
      %733 = vmatpush.bf16.msra.mxu0 0
      %734 = vmatpush.bf16.msra.mxu0 %v725
      %735 = vmatmul.bf16.gmra.mxu0 %v722
      %v736 = vpop.f32.mrf.mxu0
      %v737 = vadd.f32 0.0, %v736
      %v738 = vpop.f32.mrf.mxu0
      %739 = vdwg.mxu0
      %v741 = vsel %vm516, %v687, 0
      %v744 = vsel %vm516, %v688, 0
      %746 = vmatpush.bf16.xpose.msra.mxu0 0
      %747 = vmatpush.bf16.xpose.msra.mxu0 0
      %748 = vmatpush.bf16.xpose.msra.mxu0 0
      %749 = vmatpush.bf16.xpose.msra.mxu0 0
      %750 = vmatpush.bf16.xpose.msra.mxu0 0
      %751 = vmatpush.bf16.xpose.msra.mxu0 0
      %752 = vmatpush.bf16.xpose.msra.mxu0 %v744
      %753 = vmatpush.bf16.xpose.msra.mxu0 %v741
      %754 = vmatmul.bf16.gmra.mxu0 %v696
      %v755 = vpop.f32.mrf.mxu0
      %v756 = vadd.f32 %v737, %v755
      %v757 = vpop.f32.mrf.mxu0
      %758 = vdwg.mxu0
      %v759 = vmul.f32 %v683, %v674
      %v760 = vmul.f32 %v684, %v674
      %v761 = vmul.f32 %v685, %v674
      %v762 = vmul.f32 %v686, %v674
      %764 = vxpose.xlu0.c.b16.start [1/8] %v720, 128
      %765 = vxpose.xlu0.c.b16.cont [2/8] 0, 128
      %766 = vxpose.xlu0.c.b16.cont [3/8] 0, 128
      %767 = vxpose.xlu0.c.b16.cont [4/8] 0, 128
      %768 = vxpose.xlu0.c.b16.cont [5/8] 0, 128
      %769 = vxpose.xlu0.c.b16.cont [6/8] 0, 128
      %770 = vxpose.xlu0.c.b16.cont [7/8] 0, 128
      %771 = vxpose.xlu0.c.b16.end [8/8] 0, 128
      %v772 = vpop.trf.xlu0
      %v773 = vpop.trf.xlu0
      %v774 = vpop.trf.xlu0
      %v775 = vpop.trf.xlu0
      %v776 = vpop.trf.xlu0
      %v777 = vpop.trf.xlu0
      %v778 = vpop.trf.xlu0
      %v779 = vpop.trf.xlu0
      %781 = vrot.lane.b32.xlu0 %v681, 112
      %v782 = vpop.permute.xlu0 %781
      %v784 = vsel %vm475, %v772, 0
      %v787 = vsel %vm475, %v773, 0
      %v790 = vsel %vm541, %v782, 0
      %792 = vmatpush.bf16.msra.mxu0 0
      %793 = vmatpush.bf16.msra.mxu0 0
      %794 = vmatpush.bf16.msra.mxu0 0
      %795 = vmatpush.bf16.msra.mxu0 0
      %796 = vmatpush.bf16.msra.mxu0 0
      %797 = vmatpush.bf16.msra.mxu0 0
      %798 = vmatpush.bf16.msra.mxu0 0
      %799 = vmatpush.bf16.msra.mxu0 %v790
      %800 = vmatmul.bf16.gmra.mxu0 %v784
      %v801 = vpop.f32.mrf.mxu0
      %v802 = vadd.f32 0.0, %v801
      %v803 = vpop.f32.mrf.mxu0
      %v804 = vadd.f32 0.0, %v803
      %805 = vmatmul.bf16.gmra.mxu0 %v787
      %v806 = vpop.f32.mrf.mxu0
      %v807 = vadd.f32 0.0, %v806
      %v808 = vpop.f32.mrf.mxu0
      %v809 = vadd.f32 0.0, %v808
      %810 = vdwg.mxu0
      %v811 = vadd.f32 %v759, %v802
      %v812 = vadd.f32 %v760, %v804
      %v813 = vadd.f32 %v761, %v807
      %v814 = vadd.f32 %v762, %v809
      %815 = vst.msk [vmem:[%s682] sm:$0xff] %vm516, %v811
      %816 = vst.msk [vmem:[%s682 + $0x8] sm:$0xff] %vm516, %v812
      %817 = vst.msk [vmem:[%s682 + $0x10] sm:$0xff] %vm516, %v813
      %818 = vst.msk [vmem:[%s682 + $0x18] sm:$0xff] %vm516, %v814
      %820 = vrot.lane.b32.xlu0 %v756, 32
      %v821 = vpop.permute.xlu0 %820
      %vm823 = vcmask 523520
      %824 = vst.msk [vmem:[#allocation2] sm:$0xff] %vm823, %v821
      %s825 = scalar_lea.vmem %s391, 4
      %v826 = vld [vmem:[%s825] sm:$0xf]
      %v827 = vunpack.c.l.bf16 %v826
      %s828 = scalar_lea.vmem %s401, 4
      %v829 = vld [vmem:[%s828] sm:$0xf]
      %v830 = vunpack.c.l.bf16 %v829
      %s831 = scalar_lea.vmem %s411, 8
      %v832 = vld [vmem:[%s831] sm:$0xff]
      %s833 = scalar_lea.vmem %s421, 4
      %v834 = vld [vmem:[%s833] sm:$0xf]
      %835 = vmatpush.msra.mxu0 0.0
      %836 = vmatpush.msra.mxu0 0.0
      %837 = vmatpush.msra.mxu0 0.0
      %838 = vmatpush.msra.mxu0 0.0
      %839 = vmatpush.msra.mxu0 0.0
      %840 = vmatpush.msra.mxu0 0.0
      %841 = vmatpush.msra.mxu0 0.0
      %842 = vmatpush.msra.mxu0 0.0
      %843 = vmatpush.msra.mxu0 0.0
      %844 = vmatpush.msra.mxu0 0.0
      %845 = vmatpush.msra.mxu0 0.0
      %846 = vmatpush.msra.mxu0 0.0
      %847 = vmatpush.msra.mxu0 0.0
      %848 = vmatpush.msra.mxu0 0.0
      %849 = vmatpush.msra.mxu0 0.0
      %850 = vmatpush.msra.mxu0 %v832
      %851 = vmatmul.f32.gmra.mxu0 %v477
      %v852 = vpop.f32.mrf.mxu0
      %v853 = vadd.f32 0.0, %v852
      %854 = vdwg.mxu0
      %v855 = vmul.f32 %v853, 1.442695
      %v856 = vpow.pop %v855
      %v857 = vrcp.pop %v856
      %v858 = vmul.f32 %v827, %v856
      %v859 = vpack.c.bf16 %v858, %v858
      %v860 = vmul.f32 %v830, %v857
      %v861 = vpack.c.bf16 %v860, %v860
      %v862 = vperm.slane %v856, 7
      %v863 = vmul.f32 %v862, %v857
      %v864 = vmul.f32 %v830, %v863
      %v865 = vpack.c.bf16 %v864, %v864
      %v866 = vld [vmem:[%s447] sm:$0xff]
      %v867 = vld [vmem:[%s447 + $0x8] sm:$0xff]
      %v868 = vld [vmem:[%s447 + $0x10] sm:$0xff]
      %v869 = vld [vmem:[%s447 + $0x18] sm:$0xff]
      %v870 = vpack.c.bf16 %v867, %v866
      %v871 = vpack.c.bf16 %v869, %v868
      %v873 = vsel %vm516, %v859, 0
      %v876 = vsel %vm516, %v861, 0
      %878 = vmatpush.bf16.xpose.msra.mxu0 0
      %879 = vmatpush.bf16.xpose.msra.mxu0 0
      %880 = vmatpush.bf16.xpose.msra.mxu0 0
      %881 = vmatpush.bf16.xpose.msra.mxu0 0
      %882 = vmatpush.bf16.xpose.msra.mxu0 0
      %883 = vmatpush.bf16.xpose.msra.mxu0 0
      %884 = vmatpush.bf16.xpose.msra.mxu0 0
      %885 = vmatpush.bf16.xpose.msra.mxu0 %v876
      %886 = vmatmul.bf16.gmra.mxu0 %v873
      %v887 = vpop.f32.mrf.mxu0
      %v888 = vadd.f32 0.0, %v887
      %v889 = vpop.f32.mrf.mxu0
      %890 = vdwg.mxu0
      %v891 = vmul.f32 %v888, %v468
      %v892 = vpack.c.bf16 %v891, %v891
      %v894 = vsel %vm475, %v892, 0
      %v897 = vsel %vm541, %v834, 0
      %899 = vmatpush.bf16.msra.mxu0 0
      %900 = vmatpush.bf16.msra.mxu0 0
      %901 = vmatpush.bf16.msra.mxu0 0
      %902 = vmatpush.bf16.msra.mxu0 0
      %903 = vmatpush.bf16.msra.mxu0 0
      %904 = vmatpush.bf16.msra.mxu0 0
      %905 = vmatpush.bf16.msra.mxu0 0
      %906 = vmatpush.bf16.msra.mxu0 %v897
      %907 = vmatmul.bf16.gmra.mxu0 %v894
      %v908 = vpop.f32.mrf.mxu0
      %v909 = vadd.f32 0.0, %v908
      %v910 = vpop.f32.mrf.mxu0
      %911 = vdwg.mxu0
      %v913 = vsel %vm516, %v870, 0
      %v916 = vsel %vm516, %v871, 0
      %918 = vmatpush.bf16.xpose.msra.mxu0 0
      %919 = vmatpush.bf16.xpose.msra.mxu0 0
      %920 = vmatpush.bf16.xpose.msra.mxu0 0
      %921 = vmatpush.bf16.xpose.msra.mxu0 0
      %922 = vmatpush.bf16.xpose.msra.mxu0 0
      %923 = vmatpush.bf16.xpose.msra.mxu0 0
      %924 = vmatpush.bf16.xpose.msra.mxu0 %v916
      %925 = vmatpush.bf16.xpose.msra.mxu0 %v913
      %926 = vmatmul.bf16.gmra.mxu0 %v873
      %v927 = vpop.f32.mrf.mxu0
      %v928 = vadd.f32 %v909, %v927
      %v929 = vpop.f32.mrf.mxu0
      %930 = vdwg.mxu0
      %v931 = vmul.f32 %v866, %v862
      %v932 = vmul.f32 %v867, %v862
      %v933 = vmul.f32 %v868, %v862
      %v934 = vmul.f32 %v869, %v862
      %935 = vxpose.xlu0.c.b16.start [1/8] %v834, 128
      %936 = vxpose.xlu0.c.b16.cont [2/8] 0, 128
      %937 = vxpose.xlu0.c.b16.cont [3/8] 0, 128
      %938 = vxpose.xlu0.c.b16.cont [4/8] 0, 128
      %939 = vxpose.xlu0.c.b16.cont [5/8] 0, 128
      %940 = vxpose.xlu0.c.b16.cont [6/8] 0, 128
      %941 = vxpose.xlu0.c.b16.cont [7/8] 0, 128
      %942 = vxpose.xlu0.c.b16.end [8/8] 0, 128
      %v943 = vpop.trf.xlu0
      %v944 = vpop.trf.xlu0
      %v945 = vpop.trf.xlu0
      %v946 = vpop.trf.xlu0
      %v947 = vpop.trf.xlu0
      %v948 = vpop.trf.xlu0
      %v949 = vpop.trf.xlu0
      %v950 = vpop.trf.xlu0
      %v952 = vsel %vm475, %v943, 0
      %v955 = vsel %vm475, %v944, 0
      %v958 = vsel %vm541, %v865, 0
      %960 = vmatpush.bf16.msra.mxu0 0
      %961 = vmatpush.bf16.msra.mxu0 0
      %962 = vmatpush.bf16.msra.mxu0 0
      %963 = vmatpush.bf16.msra.mxu0 0
      %964 = vmatpush.bf16.msra.mxu0 0
      %965 = vmatpush.bf16.msra.mxu0 0
      %966 = vmatpush.bf16.msra.mxu0 0
      %967 = vmatpush.bf16.msra.mxu0 %v958
      %968 = vmatmul.bf16.gmra.mxu0 %v952
      %v969 = vpop.f32.mrf.mxu0
      %v970 = vadd.f32 0.0, %v969
      %v971 = vpop.f32.mrf.mxu0
      %v972 = vadd.f32 0.0, %v971
      %973 = vmatmul.bf16.gmra.mxu0 %v955
      %v974 = vpop.f32.mrf.mxu0
      %v975 = vadd.f32 0.0, %v974
      %v976 = vpop.f32.mrf.mxu0
      %v977 = vadd.f32 0.0, %v976
      %978 = vdwg.mxu0
      %v979 = vadd.f32 %v931, %v970
      %v980 = vadd.f32 %v932, %v972
      %v981 = vadd.f32 %v933, %v975
      %v982 = vadd.f32 %v934, %v977
      %983 = vst.msk [vmem:[%s447] sm:$0xff] %vm516, %v979
      %984 = vst.msk [vmem:[%s447 + $0x8] sm:$0xff] %vm516, %v980
      %985 = vst.msk [vmem:[%s447 + $0x10] sm:$0xff] %vm516, %v981
      %986 = vst.msk [vmem:[%s447 + $0x18] sm:$0xff] %vm516, %v982
      %s987 = scalar_lea.vmem [#allocation2], 8
      %988 = vst.msk [vmem:[%s987] sm:$0xff] %vm633, %v928
      %990 = vrot.lane.b32.xlu0 %v832, 112
      %v991 = vpop.permute.xlu0 %990
      %993 = vmatpush.msra.mxu0 0.0
      %994 = vmatpush.msra.mxu0 0.0
      %995 = vmatpush.msra.mxu0 0.0
      %996 = vmatpush.msra.mxu0 0.0
      %997 = vmatpush.msra.mxu0 0.0
      %998 = vmatpush.msra.mxu0 0.0
      %999 = vmatpush.msra.mxu0 0.0
      %1000 = vmatpush.msra.mxu0 0.0
      %1001 = vmatpush.msra.mxu0 0.0
      %1002 = vmatpush.msra.mxu0 0.0
      %1003 = vmatpush.msra.mxu0 0.0
      %1004 = vmatpush.msra.mxu0 0.0
      %1005 = vmatpush.msra.mxu0 0.0
      %1006 = vmatpush.msra.mxu0 0.0
      %1007 = vmatpush.msra.mxu0 0.0
      %1008 = vmatpush.msra.mxu0 %v991
      %1009 = vmatmul.f32.gmra.mxu0 %v477
      %v1010 = vpop.f32.mrf.mxu0
      %v1011 = vadd.f32 0.0, %v1010
      %1012 = vdwg.mxu0
      %v1013 = vmul.f32 %v1011, 1.442695
      %v1014 = vpow.pop %v1013
      %v1015 = vrcp.pop %v1014
      %1017 = vrot.lane.b32.xlu0 %v1014, 16
      %v1018 = vpop.permute.xlu0 %1017
      %v1020 = vmul.f32 %v827, %v1018
      %v1021 = vpack.c.bf16 %v1020, %v1020
      %1023 = vrot.lane.b32.xlu0 %v1015, 16
      %v1024 = vpop.permute.xlu0 %1023
      %v1026 = vmul.f32 %v830, %v1024
      %v1027 = vpack.c.bf16 %v1026, %v1026
      %v1028 = vperm.slane %v1014, 7
      %v1029 = vmul.f32 %v1028, %v1015
      %1031 = vrot.lane.b32.xlu0 %v1029, 16
      %v1032 = vpop.permute.xlu0 %1031
      %v1034 = vmul.f32 %v830, %v1032
      %v1035 = vpack.c.bf16 %v1034, %v1034
      %v1036 = vld [vmem:[%s682] sm:$0xff]
      %v1037 = vld [vmem:[%s682 + $0x8] sm:$0xff]
      %v1038 = vld [vmem:[%s682 + $0x10] sm:$0xff]
      %v1039 = vld [vmem:[%s682 + $0x18] sm:$0xff]
      %v1040 = vpack.c.bf16 %v1037, %v1036
      %v1041 = vpack.c.bf16 %v1039, %v1038
      %1043 = vrot.lane.b32.xlu0 %v1021, 112
      %v1044 = vpop.permute.xlu0 %1043
      %1046 = vrot.lane.b32.xlu0 %v1027, 112
      %v1047 = vpop.permute.xlu0 %1046
      %v1049 = vsel %vm516, %v1044, 0
      %v1052 = vsel %vm516, %v1047, 0
      %1054 = vmatpush.bf16.xpose.msra.mxu0 0
      %1055 = vmatpush.bf16.xpose.msra.mxu0 0
      %1056 = vmatpush.bf16.xpose.msra.mxu0 0
      %1057 = vmatpush.bf16.xpose.msra.mxu0 0
      %1058 = vmatpush.bf16.xpose.msra.mxu0 0
      %1059 = vmatpush.bf16.xpose.msra.mxu0 0
      %1060 = vmatpush.bf16.xpose.msra.mxu0 0
      %1061 = vmatpush.bf16.xpose.msra.mxu0 %v1052
      %1062 = vmatmul.bf16.gmra.mxu0 %v1049
      %v1063 = vpop.f32.mrf.mxu0
      %v1064 = vadd.f32 0.0, %v1063
      %v1065 = vpop.f32.mrf.mxu0
      %1066 = vdwg.mxu0
      %v1067 = vmul.f32 %v1064, %v468
      %v1068 = vpack.c.bf16 %v1067, %v1067
      %v1070 = vunpack.c.l.b16 %v834
      %v1071 = vpack.c.b16 %v1070, %v1070
      %1072 = vrot.lane.b32.xlu0 %v1071, 96
      %v1073 = vpop.permute.xlu0 %1072
      %v1075 = vsel %vm475, %v1068, 0
      %v1078 = vsel %vm541, %v1073, 0
      %1080 = vmatpush.bf16.msra.mxu0 0
      %1081 = vmatpush.bf16.msra.mxu0 0
      %1082 = vmatpush.bf16.msra.mxu0 0
      %1083 = vmatpush.bf16.msra.mxu0 0
      %1084 = vmatpush.bf16.msra.mxu0 0
      %1085 = vmatpush.bf16.msra.mxu0 0
      %1086 = vmatpush.bf16.msra.mxu0 0
      %1087 = vmatpush.bf16.msra.mxu0 %v1078
      %1088 = vmatmul.bf16.gmra.mxu0 %v1075
      %v1089 = vpop.f32.mrf.mxu0
      %v1090 = vadd.f32 0.0, %v1089
      %v1091 = vpop.f32.mrf.mxu0
      %1092 = vdwg.mxu0
      %v1094 = vsel %vm516, %v1040, 0
      %v1097 = vsel %vm516, %v1041, 0
      %1099 = vmatpush.bf16.xpose.msra.mxu0 0
      %1100 = vmatpush.bf16.xpose.msra.mxu0 0
      %1101 = vmatpush.bf16.xpose.msra.mxu0 0
      %1102 = vmatpush.bf16.xpose.msra.mxu0 0
      %1103 = vmatpush.bf16.xpose.msra.mxu0 0
      %1104 = vmatpush.bf16.xpose.msra.mxu0 0
      %1105 = vmatpush.bf16.xpose.msra.mxu0 %v1097
      %1106 = vmatpush.bf16.xpose.msra.mxu0 %v1094
      %1107 = vmatmul.bf16.gmra.mxu0 %v1049
      %v1108 = vpop.f32.mrf.mxu0
      %v1109 = vadd.f32 %v1090, %v1108
      %v1110 = vpop.f32.mrf.mxu0
      %1111 = vdwg.mxu0
      %v1112 = vmul.f32 %v1036, %v1028
      %v1113 = vmul.f32 %v1037, %v1028
      %v1114 = vmul.f32 %v1038, %v1028
      %v1115 = vmul.f32 %v1039, %v1028
      %1117 = vxpose.xlu0.c.b16.start [1/8] %v1073, 128
      %1118 = vxpose.xlu0.c.b16.cont [2/8] 0, 128
      %1119 = vxpose.xlu0.c.b16.cont [3/8] 0, 128
      %1120 = vxpose.xlu0.c.b16.cont [4/8] 0, 128
      %1121 = vxpose.xlu0.c.b16.cont [5/8] 0, 128
      %1122 = vxpose.xlu0.c.b16.cont [6/8] 0, 128
      %1123 = vxpose.xlu0.c.b16.cont [7/8] 0, 128
      %1124 = vxpose.xlu0.c.b16.end [8/8] 0, 128
      %v1125 = vpop.trf.xlu0
      %v1126 = vpop.trf.xlu0
      %v1127 = vpop.trf.xlu0
      %v1128 = vpop.trf.xlu0
      %v1129 = vpop.trf.xlu0
      %v1130 = vpop.trf.xlu0
      %v1131 = vpop.trf.xlu0
      %v1132 = vpop.trf.xlu0
      %1134 = vrot.lane.b32.xlu0 %v1035, 112
      %v1135 = vpop.permute.xlu0 %1134
      %v1137 = vsel %vm475, %v1125, 0
      %v1140 = vsel %vm475, %v1126, 0
      %v1143 = vsel %vm541, %v1135, 0
      %1145 = vmatpush.bf16.msra.mxu0 0
      %1146 = vmatpush.bf16.msra.mxu0 0
      %1147 = vmatpush.bf16.msra.mxu0 0
      %1148 = vmatpush.bf16.msra.mxu0 0
      %1149 = vmatpush.bf16.msra.mxu0 0
      %1150 = vmatpush.bf16.msra.mxu0 0
      %1151 = vmatpush.bf16.msra.mxu0 0
      %1152 = vmatpush.bf16.msra.mxu0 %v1143
      %1153 = vmatmul.bf16.gmra.mxu0 %v1137
      %v1154 = vpop.f32.mrf.mxu0
      %v1155 = vadd.f32 0.0, %v1154
      %v1156 = vpop.f32.mrf.mxu0
      %v1157 = vadd.f32 0.0, %v1156
      %1158 = vmatmul.bf16.gmra.mxu0 %v1140
      %v1159 = vpop.f32.mrf.mxu0
      %v1160 = vadd.f32 0.0, %v1159
      %v1161 = vpop.f32.mrf.mxu0
      %v1162 = vadd.f32 0.0, %v1161
      %1163 = vdwg.mxu0
      %v1164 = vadd.f32 %v1112, %v1155
      %v1165 = vadd.f32 %v1113, %v1157
      %v1166 = vadd.f32 %v1114, %v1160
      %v1167 = vadd.f32 %v1115, %v1162
      %1168 = vst.msk [vmem:[%s682] sm:$0xff] %vm516, %v1164
      %1169 = vst.msk [vmem:[%s682 + $0x8] sm:$0xff] %vm516, %v1165
      %1170 = vst.msk [vmem:[%s682 + $0x10] sm:$0xff] %vm516, %v1166
      %1171 = vst.msk [vmem:[%s682 + $0x18] sm:$0xff] %vm516, %v1167
      %1173 = vrot.lane.b32.xlu0 %v1109, 32
      %v1174 = vpop.permute.xlu0 %1173
      %1176 = vst.msk [vmem:[%s987] sm:$0xff] %vm823, %v1174
      %v1177 = vld [vmem:[#allocation2] sm:$0xff]
      %v1178 = vld [vmem:[#allocation2 + $0x8] sm:$0xff]
      %v1179 = vsel %vm633, %v1177, 0.0
      %1180 = vadd.xlane.f32.xlu0 %v1179
      %v1181 = vpop.xlane.xlu0 %1180
      %v1182 = vsel %vm633, %v1178, 0.0
      %1183 = vadd.xlane.f32.xlu0 %v1182
      %v1184 = vpop.xlane.xlu0 %1183
      %v1185 = vrcp.pop 32.0
      %v1186 = vmul.f32 32.0, %v1185
      %v1187 = vsub.f32 1.0, %v1186
      %v1188 = vmul.f32 %v1185, %v1187
      %v1189 = vadd.f32 %v1185, %v1188
      %vm1190 = vweird.f32 %v1185
      %v1191 = vsel %vm1190, %v1185, %v1189
      %v1192 = vmul.f32 %v1181, %v1191
      %v1193 = vmul.f32 %v1184, %v1191
      %v1194 = vsub.f32 %v1177, %v1192
      %v1195 = vsub.f32 %v1178, %v1193
      %v1196 = vmul.f32 %v1194, %v1194
      %v1197 = vmul.f32 %v1195, %v1195
      %v1198 = vsel %vm633, %v1196, 0.0
      %1199 = vadd.xlane.f32.xlu0 %v1198
      %v1200 = vpop.xlane.xlu0 %1199
      %v1201 = vsel %vm633, %v1197, 0.0
      %1202 = vadd.xlane.f32.xlu0 %v1201
      %v1203 = vpop.xlane.xlu0 %1202
      %v1204 = vmul.f32 %v1200, %v1191
      %v1205 = vmul.f32 %v1203, %v1191
      %v1206 = vadd.f32 %v1204, 1e-05
      %v1207 = vadd.f32 %v1205, 1e-05
      %v1208 = vrsqrt.pop %v1206
      %v1209 = vmul.f32 %v1208, %v1206
      %v1210 = vmul.f32 %v1209, %v1208
      %v1211 = vmul.f32 0.5, %v1210
      %v1212 = vsub.f32 1.5, %v1211
      %v1213 = vmul.f32 %v1208, %v1212
      %vm1214 = vweird.f32 %v1206
      %vm1215 = vweird.f32 %v1208
      %vm1216 = vmor %vm1214, %vm1215
      %v1217 = vsel %vm1216, %v1208, %v1213
      %v1218 = vrsqrt.pop %v1207
      %v1219 = vmul.f32 %v1218, %v1207
      %v1220 = vmul.f32 %v1219, %v1218
      %v1221 = vmul.f32 0.5, %v1220
      %v1222 = vsub.f32 1.5, %v1221
      %v1223 = vmul.f32 %v1218, %v1222
      %vm1224 = vweird.f32 %v1207
      %vm1225 = vweird.f32 %v1218
      %vm1226 = vmor %vm1224, %vm1225
      %v1227 = vsel %vm1226, %v1218, %v1223
      %v1228 = vmul.f32 %v1194, %v1217
      %v1229 = vmul.f32 %v1195, %v1227
      %1230 = vst.msk [vmem:[#allocation2] sm:$0xff] %vm633, %v1228
      %1231 = vst.msk [vmem:[#allocation2 + $0x8] sm:$0xff] %vm633, %v1229
      %v1232 = vld [vmem:[#allocation2] sm:$0xff]
      %v1233 = vld [vmem:[#allocation2 + $0x8] sm:$0xff]
      %1236 = vrot.lane.b32.xlu0 %v1232, 96
      %v1237 = vpop.permute.xlu0 %1236
      %1238 = vrot.lane.b32.xlu0 %v1233, 96
      %v1239 = vpop.permute.xlu0 %1238
      %v1242 = vsel %vm633, %v1237, 0.0
      %1243 = vadd.xlane.f32.xlu0 %v1242
      %v1244 = vpop.xlane.xlu0 %1243
      %v1245 = vsel %vm633, %v1239, 0.0
      %1246 = vadd.xlane.f32.xlu0 %v1245
      %v1247 = vpop.xlane.xlu0 %1246
      %v1248 = vmul.f32 %v1244, %v1191
      %v1249 = vmul.f32 %v1247, %v1191
      %v1250 = vsub.f32 %v1232, %v1248
      %v1251 = vsub.f32 %v1233, %v1249
      %v1252 = vmul.f32 %v1250, %v1250
      %v1253 = vmul.f32 %v1251, %v1251
      %1256 = vrot.lane.b32.xlu0 %v1252, 96
      %v1257 = vpop.permute.xlu0 %1256
      %1258 = vrot.lane.b32.xlu0 %v1253, 96
      %v1259 = vpop.permute.xlu0 %1258
      %v1262 = vsel %vm633, %v1257, 0.0
      %1263 = vadd.xlane.f32.xlu0 %v1262
      %v1264 = vpop.xlane.xlu0 %1263
      %v1265 = vsel %vm633, %v1259, 0.0
      %1266 = vadd.xlane.f32.xlu0 %v1265
      %v1267 = vpop.xlane.xlu0 %1266
      %v1268 = vmul.f32 %v1264, %v1191
      %v1269 = vmul.f32 %v1267, %v1191
      %v1270 = vadd.f32 %v1268, 1e-05
      %v1271 = vadd.f32 %v1269, 1e-05
      %v1272 = vrsqrt.pop %v1270
      %v1273 = vmul.f32 %v1272, %v1270
      %v1274 = vmul.f32 %v1273, %v1272
      %v1275 = vmul.f32 0.5, %v1274
      %v1276 = vsub.f32 1.5, %v1275
      %v1277 = vmul.f32 %v1272, %v1276
      %vm1278 = vweird.f32 %v1270
      %vm1279 = vweird.f32 %v1272
      %vm1280 = vmor %vm1278, %vm1279
      %v1281 = vsel %vm1280, %v1272, %v1277
      %v1282 = vrsqrt.pop %v1271
      %v1283 = vmul.f32 %v1282, %v1271
      %v1284 = vmul.f32 %v1283, %v1282
      %v1285 = vmul.f32 0.5, %v1284
      %v1286 = vsub.f32 1.5, %v1285
      %v1287 = vmul.f32 %v1282, %v1286
      %vm1288 = vweird.f32 %v1271
      %vm1289 = vweird.f32 %v1282
      %vm1290 = vmor %vm1288, %vm1289
      %v1291 = vsel %vm1290, %v1282, %v1287
      %v1292 = vmul.f32 %v1250, %v1281
      %v1293 = vmul.f32 %v1251, %v1291
      %1294 = vst.msk [vmem:[#allocation2] sm:$0xff] %vm823, %v1292
      %1295 = vst.msk [vmem:[#allocation2 + $0x8] sm:$0xff] %vm823, %v1293
      %v1296 = vld [vmem:[%s431] sm:$0xf]
      %v1297 = vld [vmem:[%s431 + $0x4] sm:$0xf]
      %v1298 = vunpack.c.l.bf16 %v1296
      %v1299 = vunpack.c.l.bf16 %v1297
      %v1300 = vsub.f32 0.0, %v1298
      %v1301 = vsub.f32 0.0, %v1299
      %v1302 = vmul.f32 %v1300, 1.442695
      %v1303 = vpow.pop %v1302
      %v1304 = vmul.f32 %v1301, 1.442695
      %v1305 = vpow.pop %v1304
      %v1306 = vadd.f32 %v1303, 1.0
      %v1307 = vadd.f32 %v1305, 1.0
      %v1308 = vrcp.pop %v1306
      %v1309 = vmul.f32 %v1306, %v1308
      %v1310 = vsub.f32 1.0, %v1309
      %v1311 = vmul.f32 %v1308, %v1310
      %v1312 = vadd.f32 %v1308, %v1311
      %vm1313 = vweird.f32 %v1306
      %vm1314 = vweird.f32 %v1308
      %vm1315 = vmor %vm1313, %vm1314
      %v1316 = vsel %vm1315, %v1308, %v1312
      %v1317 = vand.u32 2147483647, %v1306
      %vm1318 = vcmp.eq.f32.partialorder %v1317, 8.507059e+37
      %v1319 = vand.u32 %v1306, 2147483648
      %v1320 = vor.u32 1.1754944e-38, %v1319
      %v1321 = vsel %vm1318, %v1320, %v1316
      %v1322 = vmul.f32 1.0, %v1321
      %v1323 = vrcp.pop %v1307
      %v1324 = vmul.f32 %v1307, %v1323
      %v1325 = vsub.f32 1.0, %v1324
      %v1326 = vmul.f32 %v1323, %v1325
      %v1327 = vadd.f32 %v1323, %v1326
      %vm1328 = vweird.f32 %v1307
      %vm1329 = vweird.f32 %v1323
      %vm1330 = vmor %vm1328, %vm1329
      %v1331 = vsel %vm1330, %v1323, %v1327
      %v1332 = vand.u32 2147483647, %v1307
      %vm1333 = vcmp.eq.f32.partialorder %v1332, 8.507059e+37
      %v1334 = vand.u32 %v1307, 2147483648
      %v1335 = vor.u32 1.1754944e-38, %v1334
      %v1336 = vsel %vm1333, %v1335, %v1331
      %v1337 = vmul.f32 1.0, %v1336
      %v1338 = vmul.f32 %v1298, %v1322
      %v1339 = vmul.f32 %v1299, %v1337
      %v1340 = vld [vmem:[#allocation2] sm:$0xff]
      %v1341 = vld [vmem:[#allocation2 + $0x8] sm:$0xff]
      %v1342 = vmul.f32 %v1338, %v1340
      %v1343 = vmul.f32 %v1339, %v1341
      %v1344 = vpack.c.bf16 %v1342, %v1342
      %v1345 = vpack.c.bf16 %v1343, %v1343
      %vm1346 = vcmask 519168
      %1347 = vst.msk [vmem:[%s441] sm:$0xf] %vm1346, %v1344
      %1348 = vst.msk [vmem:[%s441 + $0x4] sm:$0xf] %vm1346, %v1345
      %s1349 = smul.u32 2, %s23
      %p1350 = scmp.lt.s32.totalorder %s22, 1
      %s1351 = scalar_select %p1350, %s22, 1
      %p1352 = scmp.lt.s32.totalorder %s1349, 3
      %s1353 = scalar_select %p1352, %s1349, 3
      %s1354 = smul.addr %s1351, 4
      %s1355 = sadd.s32 %s1353, %s1354
      %s1356 = smul.addr %s1355, 4
      %s1357 = scalar_lea.vmem %s5, %s1356
      %p1358 = scmp.lt.s32.totalorder %s22, 1
      %s1359 = scalar_select %p1358, %s22, 1
      %s1360 = smul.addr %s1359, 8
      %s1361 = smul.addr %s1360, 8
      %s1362 = scalar_lea.vmem %s6, %s1361
      // Predicated region
      $region45: #{gla_forward.1} parent=39 // pred_check
        %p1363 = pneg %p190
      $region46: #{gla_forward.1} parent=39 // pred_check_branch
        %1365 = sbr.rel (%p1363) target = $region48
      $region47: #{gla_forward.1} parent=39 // pred_region
        %s1366 = smul.u32 2, %s23
      $region48: #{gla_forward.1} parent=39 // pred_fallthru
        _
      // Predicated region
      $region49: #{gla_forward.1} parent=39 // pred_check
        %p1367 = pneg %p216
      $region50: #{gla_forward.1} parent=39 // pred_check_branch
        %1369 = sbr.rel (%p1367) target = $region52
      $region51: #{gla_forward.1} parent=39 // pred_region
        _
      $region52: #{gla_forward.1} parent=39 // pred_fallthru
        _
    $region40: #{gla_forward.1} parent=5 // pred_fallthru
      _
    %p1370 = scmp.le.s32.totalorder 2, %s13
    // Predicated region
    $region53: #{gla_forward.1} parent=5 // pred_check
      %p1371 = pneg %p1370
    $region54: #{gla_forward.1} parent=5 // pred_check_branch
      %1373 = sbr.rel (%p1371) target = $region56
    $region55: #{gla_forward.1} parent=5 // pred_region
      %s1374 = ssub.s32 %s13, 2
      // Predicated region
      $region57: #{gla_forward.1} parent=55 // pred_check
        %p1375 = pneg %p196
      $region58: #{gla_forward.1} parent=55 // pred_check_branch
        %1377 = sbr.rel (%p1375) target = $region60
      $region59: #{gla_forward.1} parent=55 // pred_region
        %s1378 = smul.u32 2, %s25
        %p1379 = scmp.lt.s32.totalorder %s24, 1
        %s1380 = scalar_select %p1379, %s24, 1
        %p1381 = scmp.lt.s32.totalorder %s1378, 3
        %s1382 = scalar_select %p1381, %s1378, 3
        %s1383 = smul.addr %s1380, 4
        %s1384 = sadd.s32 %s1382, %s1383
        %s1385 = smul.addr %s1384, 4
        %s1386 = scalar_lea.vmem %s5, %s1385
      $region60: #{gla_forward.1} parent=55 // pred_fallthru
        _
      // Predicated region
      $region61: #{gla_forward.1} parent=55 // pred_check
        %p1387 = pneg %p222
      $region62: #{gla_forward.1} parent=55 // pred_check_branch
        %1389 = sbr.rel (%p1387) target = $region64
      $region63: #{gla_forward.1} parent=55 // pred_region
        %p1390 = scmp.lt.s32.totalorder %s24, 1
        %s1391 = scalar_select %p1390, %s24, 1
        %s1392 = smul.addr %s1391, 8
        %s1393 = smul.addr %s1392, 8
        %s1394 = scalar_lea.vmem %s6, %s1393
      $region64: #{gla_forward.1} parent=55 // pred_fallthru
        _
    $region56: #{gla_forward.1} parent=5 // pred_fallthru
      _
  $region6: #{gla_forward.1} parent=0 // loop_footer
    %s17 = sadd.s32 1, %s13
  $region7: #{gla_forward.1} parent=0 // loop_footer_branch
    %12 = sbr.rel target = $region3
  $region8: #{gla_forward.1} parent=0 // loop_exit
    _

</llo_original>
